<compile_context>
chip_gen: v7x
topology: tpu7x:2x2x1
jax: 0.10.0
libtpu: 0.0.40
codegen_flags: <defaults>
</compile_context>

<pallas_src>
import functools

import jax
import jax.numpy as jnp
from jax.experimental import pallas as pl
from jax.experimental.pallas import tpu as pltpu


# ---------------------------------------------------------------------------
# Fused kernel: one program = Bb batch elements, full MHA forward in VMEM.
# ---------------------------------------------------------------------------
def _mha_fused_kernel(q_ref, k_ref, v_ref,
                      wq_ref, bq_ref, wk_ref, bk_ref, wv_ref, bv_ref,
                      wo_ref, bo_ref,
                      o_ref, *, batch_block, seq_len, num_heads, head_dim):
    Bb, S, H, D = batch_block, seq_len, num_heads, head_dim
    M = Bb * S
    f32 = jnp.float32

    # --- Fused Q/K/V projections: one fat, lane-dense matmul per input ------
    # (Bb*S, D_in) @ (D_in, H*D) -> (Bb*S, H*D); batch collapsed into M.
    q2 = q_ref[...].reshape(M, -1)
    k2 = k_ref[...].reshape(M, -1)
    v2 = v_ref[...].reshape(M, -1)
    qp = jnp.dot(q2, wq_ref[...], preferred_element_type=f32) + bq_ref[0]
    kp = jnp.dot(k2, wk_ref[...], preferred_element_type=f32) + bk_ref[0]
    vp = jnp.dot(v2, wv_ref[...], preferred_element_type=f32) + bv_ref[0]

    def to_heads(x):
        # (S, H*D) -> (H, S, D) head-major stack (static lane slices + leading-
        # axis stack; keeps all relayouts on well-supported paths).
        return jnp.stack([x[:, h * D:(h + 1) * D] for h in range(H)], axis=0)

    # --- Attention: head-batched MXU work, per batch element ----------------
    for b in range(Bb):                      # static unroll; Bb is small
        lo = b * S
        qh = to_heads(qp[lo:lo + S])         # (H, S, D)
        kh = to_heads(kp[lo:lo + S])
        vh = to_heads(vp[lo:lo + S])

        # Head-batched scores; contraction on head_dim (no explicit kh.T --
        # K is fed as the MXU's transposed operand).
        # Reference applies NO 1/sqrt(d_k) scaling -- intentional match.
        s = jnp.einsum("hqd,hkd->hqk", qh, kh, preferred_element_type=f32)

        m = jnp.max(s, axis=-1, keepdims=True)
        p = jnp.exp(s - m)
        l = jnp.sum(p, axis=-1, keepdims=True)

        # Unnormalised attn@V, then a single per-row scale: S*D multiplies
        # instead of S*S divides; reciprocal runs on the EUP slot.
        o = jnp.einsum("hqk,hkd->hqd", p, vh, preferred_element_type=f32)
        o = o * pl.reciprocal(l, approx=False)

        # Head concat in VMEM, then the 128-wide-contraction output projection.
        cat = jnp.concatenate([o[h] for h in range(H)], axis=-1)     # (S, H*D)
        y = jnp.dot(cat, wo_ref[...], preferred_element_type=f32) + bo_ref[0]

        o_ref[b] = y.astype(o_ref.dtype)


# ---------------------------------------------------------------------------
# Wrapper
# ---------------------------------------------------------------------------
@jax.jit
def multi_head_attention(query, key, value, params):
    """query/key/value: (B, S, D_in) float32."""
    wq, bq, wk, bk, wv, bv, wo, bo = (
        params["wq"], params["bq"], params["wk"], params["bk"],
        params["wv"], params["bv"], params["wo"], params["bo"])

    B, S, D_in = query.shape
    H, _, D_out = wq.shape
    HD = H * D_out

    # Pack per-head (H, D_in, D_out) weights into fused (D_in, H*D_out) form so
    # column block h corresponds to head h; biases -> (1, H*D_out).
    def pack_w(w):
        return jnp.transpose(w, (1, 0, 2)).reshape(D_in, HD)

    def pack_b(b):
        return b.reshape(1, HD)

    wq_f, wk_f, wv_f = pack_w(wq), pack_w(wk), pack_w(wv)
    bq_f, bk_f, bv_f = pack_b(bq), pack_b(bk), pack_b(bv)

    # Grid: >=2 programs whenever possible (v7x has 2 TensorCores sharing a
    # "parallel" axis) while collapsing as much batch as possible into each
    # program's matmul M dimension (cap the static unroll at 8 elems/program).
    if B == 1:
        num_programs = 1
    else:
        num_programs = max(2, pl.cdiv(B, 8))
        while B % num_programs:
            num_programs += 1
    Bb = B // num_programs

    # VMEM budget guard: the full (H,S,S) scores + (Bb*S,HD) intermediates
    # approach must become KV-tiled (flash-style online softmax) before S grows
    # past ~1-2k (v5e 16 MiB scoped default; v6e/v7x 32 MiB; v7x 64 MiB phys).
    est_bytes = 4 * (
        2 * 3 * Bb * S * D_in + 2 * Bb * S * D_out              # pipelined I/O
        + 2 * (3 * (D_in * HD + HD) + HD * D_out + D_out)       # resident weights
        + 3 * Bb * S * HD + H * S * S + 2 * H * S * D_out       # intermediates
        + Bb * S * D_out)
    if est_bytes > 24 * 1024 * 1024:
        # TODO(synk): implement the KV-tiled online-softmax loop for large S.
        raise NotImplementedError(
            f"Estimated VMEM {est_bytes / 2**20:.1f} MiB exceeds the safe "
            "budget; a flash-style KV-tiled path is required at this size.")

    kernel = functools.partial(_mha_fused_kernel, batch_block=Bb, seq_len=S,
                               num_heads=H, head_dim=D_out)

    # Advisory cost estimate (flops / exp count / HBM traffic).
    flops = (3 * 2 * B * S * D_in * HD          # Q/K/V projections
             + 2 * 2 * B * H * S * S * D_out    # scores + attn@V
             + 2 * B * S * HD * D_out)          # output projection
    bytes_accessed = 4 * (3 * B * S * D_in
                          + 3 * (D_in * HD + HD)
                          + HD * D_out + D_out
                          + B * S * D_out)
    cost = pl.CostEstimate(flops=flops,
                           transcendentals=B * H * S * S + B * H * S,
                           bytes_accessed=bytes_accessed)

    # Weight specs ignore the grid index -> they stay VMEM-resident across all
    # grid steps (no redundant per-step weight DMAs).
    w_spec = pl.BlockSpec((D_in, HD), lambda g: (0, 0))
    bias_spec = pl.BlockSpec((1, HD), lambda g: (0, 0))
    qkv_spec = pl.BlockSpec((Bb, S, D_in), lambda g: (g, 0, 0))

    out = pl.pallas_call(
        kernel,
        out_shape=jax.ShapeDtypeStruct((B, S, D_out), jnp.float32),
        grid_spec=pltpu.PrefetchScalarGridSpec(
            num_scalar_prefetch=0,
            grid=(num_programs,),
            in_specs=[
                qkv_spec,                                          # query
                qkv_spec,                                          # key
                qkv_spec,                                          # value
                w_spec, bias_spec,                                 # Wq, bq
                w_spec, bias_spec,                                 # Wk, bk
                w_spec, bias_spec,                                 # Wv, bv
                pl.BlockSpec((HD, D_out), lambda g: (0, 0)),       # Wo
                pl.BlockSpec((1, D_out), lambda g: (0, 0)),        # bo
            ],
            out_specs=pl.BlockSpec((Bb, S, D_out), lambda g: (g, 0, 0)),
        ),
        compiler_params=pltpu.CompilerParams(
            dimension_semantics=("parallel",)),
        cost_estimate=cost,
    )(query, key, value, wq_f, bq_f, wk_f, bk_f, wv_f, bv_f, wo, bo)

    return out


# ---------------------------------------------------------------------------
# Deterministic parameter init (mimics torch.nn.Linear default: U[-k, k],
# k = 1/sqrt(fan_in)); weights are built directly in (in, out) layout.
# ---------------------------------------------------------------------------
def init_params(key, num_heads, input_dim, output_dim):
    keys = jax.random.split(key, 8)
    k_in = 1.0 / jnp.sqrt(jnp.float32(input_dim))
    k_cat = 1.0 / jnp.sqrt(jnp.float32(num_heads * output_dim))

    def u(k, shape, bound):
        return jax.random.uniform(k, shape, jnp.float32, -bound, bound)

    return {
        "wq": u(keys[0], (num_heads, input_dim, output_dim), k_in),
        "bq": u(keys[1], (num_heads, 1, output_dim), k_in),
        "wk": u(keys[2], (num_heads, input_dim, output_dim), k_in),
        "bk": u(keys[3], (num_heads, 1, output_dim), k_in),
        "wv": u(keys[4], (num_heads, input_dim, output_dim), k_in),
        "bv": u(keys[5], (num_heads, 1, output_dim), k_in),
        "wo": u(keys[6], (num_heads * output_dim, output_dim), k_cat),
        "bo": u(keys[7], (1, output_dim), k_cat),
    }


# ---------------------------------------------------------------------------
# Pure-JAX reference (mirrors the PyTorch forward, mask=None)
# ---------------------------------------------------------------------------
def reference(query, key, value, params):
    outs = []
    H = params["wq"].shape[0]
    for i in range(H):
        qp = query @ params["wq"][i] + params["bq"][i, 0]
        kp = key @ params["wk"][i] + params["bk"][i, 0]
        vp = value @ params["wv"][i] + params["bv"][i, 0]
        scores = jnp.einsum("bsd,btd->bst", qp, kp)
        attn = jax.nn.softmax(scores, axis=-1)
        outs.append(jnp.einsum("bst,btd->bsd", attn, vp))
    concat = jnp.concatenate(outs, axis=-1)
    return concat @ params["wo"] + params["bo"][0]


if __name__ == "__main__":
    B, S = 2, 8
    num_heads, input_dim, output_dim = 4, 16, 32

    root = jax.random.PRNGKey(0)
    kq, kk, kv, kp = jax.random.split(root, 4)
    query = jax.random.normal(kq, (B, S, input_dim), jnp.float32)
    key = jax.random.normal(kk, (B, S, input_dim), jnp.float32)
    value = jax.random.normal(kv, (B, S, input_dim), jnp.float32)
    params = init_params(kp, num_heads, input_dim, output_dim)

    out = multi_head_attention(query, key, value, params)
    out = jax.block_until_ready(out)

    ref = reference(query, key, value, params)
    assert out.shape == (B, S, output_dim)
    assert jnp.allclose(out, ref, atol=1e-4, rtol=1e-4), "mismatch vs reference"

    print("KERNEL_OK")
</pallas_src>

<mosaic_0001>
module attributes {stable_mosaic.version = 11 : i64} {
  func.func @_mha_fused_kernel(%arg0: i32, %arg1: memref<1x8x16xf32, #tpu.memory_space<vmem>>, %arg2: memref<1x8x16xf32, #tpu.memory_space<vmem>>, %arg3: memref<1x8x16xf32, #tpu.memory_space<vmem>>, %arg4: memref<16x128xf32, #tpu.memory_space<vmem>>, %arg5: memref<1x128xf32, #tpu.memory_space<vmem>>, %arg6: memref<16x128xf32, #tpu.memory_space<vmem>>, %arg7: memref<1x128xf32, #tpu.memory_space<vmem>>, %arg8: memref<16x128xf32, #tpu.memory_space<vmem>>, %arg9: memref<1x128xf32, #tpu.memory_space<vmem>>, %arg10: memref<128x32xf32, #tpu.memory_space<vmem>>, %arg11: memref<1x32xf32, #tpu.memory_space<vmem>>, %arg12: memref<1x8x32xf32, #tpu.memory_space<vmem>>) attributes {dimension_semantics = [#tpu.dimension_semantics<parallel>], iteration_bounds = array<i64: 2>, scalar_prefetch = 0 : i64, scratch_operands = 0 : i64, tpu.core_type = #tpu.core_type<tc>, window_params = [{transform_indices = @transform_0, window_bounds = array<i64: 1, 8, 16>}, {transform_indices = @transform_1, window_bounds = array<i64: 1, 8, 16>}, {transform_indices = @transform_2, window_bounds = array<i64: 1, 8, 16>}, {pipeline_mode = #tpu.pipeline_mode<synchronous>, transform_indices = @transform_3, window_bounds = array<i64: 16, 128>}, {pipeline_mode = #tpu.pipeline_mode<synchronous>, transform_indices = @transform_4, window_bounds = array<i64: 1, 128>}, {pipeline_mode = #tpu.pipeline_mode<synchronous>, transform_indices = @transform_5, window_bounds = array<i64: 16, 128>}, {pipeline_mode = #tpu.pipeline_mode<synchronous>, transform_indices = @transform_6, window_bounds = array<i64: 1, 128>}, {pipeline_mode = #tpu.pipeline_mode<synchronous>, transform_indices = @transform_7, window_bounds = array<i64: 16, 128>}, {pipeline_mode = #tpu.pipeline_mode<synchronous>, transform_indices = @transform_8, window_bounds = array<i64: 1, 128>}, {pipeline_mode = #tpu.pipeline_mode<synchronous>, transform_indices = @transform_9, window_bounds = array<i64: 128, 32>}, {pipeline_mode = #tpu.pipeline_mode<synchronous>, transform_indices = @transform_10, window_bounds = array<i64: 1, 32>}, {transform_indices = @transform_11, window_bounds = array<i64: 1, 8, 32>}]} {
    %c0 = arith.constant 0 : index
    %c0_0 = arith.constant 0 : index
    %c0_1 = arith.constant 0 : index
    %0 = vector.load %arg1[%c0, %c0_0, %c0_1] : memref<1x8x16xf32, #tpu.memory_space<vmem>>, vector<1x8x16xf32>
    %1 = vector.shape_cast %0 : vector<1x8x16xf32> to vector<8x16xf32>
    %c0_2 = arith.constant 0 : index
    %c0_3 = arith.constant 0 : index
    %c0_4 = arith.constant 0 : index
    %2 = vector.load %arg2[%c0_2, %c0_3, %c0_4] : memref<1x8x16xf32, #tpu.memory_space<vmem>>, vector<1x8x16xf32>
    %3 = vector.shape_cast %2 : vector<1x8x16xf32> to vector<8x16xf32>
    %c0_5 = arith.constant 0 : index
    %c0_6 = arith.constant 0 : index
    %c0_7 = arith.constant 0 : index
    %4 = vector.load %arg3[%c0_5, %c0_6, %c0_7] : memref<1x8x16xf32, #tpu.memory_space<vmem>>, vector<1x8x16xf32>
    %5 = vector.shape_cast %4 : vector<1x8x16xf32> to vector<8x16xf32>
    %c0_8 = arith.constant 0 : index
    %c0_9 = arith.constant 0 : index
    %6 = vector.load %arg4[%c0_8, %c0_9] : memref<16x128xf32, #tpu.memory_space<vmem>>, vector<16x128xf32>
    %cst = arith.constant dense<0.000000e+00> : vector<8x128xf32>
    %7 = tpu.matmul %1, %6, %cst {dimension_numbers = #tpu.dot_dimension_numbers<[1], [0], [0], [1], [0, 0, 1, 1], [], []>} : vector<8x16xf32>, vector<16x128xf32>, vector<8x128xf32> -> vector<8x128xf32>
    %c0_10 = arith.constant 0 : index
    %c0_11 = arith.constant 0 : index
    %8 = vector.load %arg5[%c0_10, %c0_11] : memref<1x128xf32, #tpu.memory_space<vmem>>, vector<1x128xf32>
    %9 = vector.shape_cast %8 : vector<1x128xf32> to vector<128xf32>
    %10 = vector.shape_cast %9 : vector<128xf32> to vector<1x128xf32>
    %11 = vector.broadcast %10 : vector<1x128xf32> to vector<8x128xf32>
    %12 = arith.addf %7, %11 : vector<8x128xf32>
    %c0_12 = arith.constant 0 : index
    %c0_13 = arith.constant 0 : index
    %13 = vector.load %arg6[%c0_12, %c0_13] : memref<16x128xf32, #tpu.memory_space<vmem>>, vector<16x128xf32>
    %cst_14 = arith.constant dense<0.000000e+00> : vector<8x128xf32>
    %14 = tpu.matmul %3, %13, %cst_14 {dimension_numbers = #tpu.dot_dimension_numbers<[1], [0], [0], [1], [0, 0, 1, 1], [], []>} : vector<8x16xf32>, vector<16x128xf32>, vector<8x128xf32> -> vector<8x128xf32>
    %c0_15 = arith.constant 0 : index
    %c0_16 = arith.constant 0 : index
    %15 = vector.load %arg7[%c0_15, %c0_16] : memref<1x128xf32, #tpu.memory_space<vmem>>, vector<1x128xf32>
    %16 = vector.shape_cast %15 : vector<1x128xf32> to vector<128xf32>
    %17 = vector.shape_cast %16 : vector<128xf32> to vector<1x128xf32>
    %18 = vector.broadcast %17 : vector<1x128xf32> to vector<8x128xf32>
    %19 = arith.addf %14, %18 : vector<8x128xf32>
    %c0_17 = arith.constant 0 : index
    %c0_18 = arith.constant 0 : index
    %20 = vector.load %arg8[%c0_17, %c0_18] : memref<16x128xf32, #tpu.memory_space<vmem>>, vector<16x128xf32>
    %cst_19 = arith.constant dense<0.000000e+00> : vector<8x128xf32>
    %21 = tpu.matmul %5, %20, %cst_19 {dimension_numbers = #tpu.dot_dimension_numbers<[1], [0], [0], [1], [0, 0, 1, 1], [], []>} : vector<8x16xf32>, vector<16x128xf32>, vector<8x128xf32> -> vector<8x128xf32>
    %c0_20 = arith.constant 0 : index
    %c0_21 = arith.constant 0 : index
    %22 = vector.load %arg9[%c0_20, %c0_21] : memref<1x128xf32, #tpu.memory_space<vmem>>, vector<1x128xf32>
    %23 = vector.shape_cast %22 : vector<1x128xf32> to vector<128xf32>
    %24 = vector.shape_cast %23 : vector<128xf32> to vector<1x128xf32>
    %25 = vector.broadcast %24 : vector<1x128xf32> to vector<8x128xf32>
    %26 = arith.addf %21, %25 : vector<8x128xf32>
    %27 = vector.extract_strided_slice %12 {offsets = [0, 0], sizes = [8, 32], strides = [1, 1]} : vector<8x128xf32> to vector<8x32xf32>
    %28 = vector.extract_strided_slice %12 {offsets = [0, 32], sizes = [8, 32], strides = [1, 1]} : vector<8x128xf32> to vector<8x32xf32>
    %29 = vector.extract_strided_slice %12 {offsets = [0, 64], sizes = [8, 32], strides = [1, 1]} : vector<8x128xf32> to vector<8x32xf32>
    %30 = vector.extract_strided_slice %12 {offsets = [0, 96], sizes = [8, 32], strides = [1, 1]} : vector<8x128xf32> to vector<8x32xf32>
    %31 = vector.shape_cast %27 : vector<8x32xf32> to vector<1x8x32xf32>
    %32 = vector.shape_cast %28 : vector<8x32xf32> to vector<1x8x32xf32>
    %33 = vector.shape_cast %29 : vector<8x32xf32> to vector<1x8x32xf32>
    %34 = vector.shape_cast %30 : vector<8x32xf32> to vector<1x8x32xf32>
    %35 = tpu.concatenate %31, %32, %33, %34 in 0 : vector<1x8x32xf32>, vector<1x8x32xf32>, vector<1x8x32xf32>, vector<1x8x32xf32> -> vector<4x8x32xf32>
    %36 = vector.extract_strided_slice %19 {offsets = [0, 0], sizes = [8, 32], strides = [1, 1]} : vector<8x128xf32> to vector<8x32xf32>
    %37 = vector.extract_strided_slice %19 {offsets = [0, 32], sizes = [8, 32], strides = [1, 1]} : vector<8x128xf32> to vector<8x32xf32>
    %38 = vector.extract_strided_slice %19 {offsets = [0, 64], sizes = [8, 32], strides = [1, 1]} : vector<8x128xf32> to vector<8x32xf32>
    %39 = vector.extract_strided_slice %19 {offsets = [0, 96], sizes = [8, 32], strides = [1, 1]} : vector<8x128xf32> to vector<8x32xf32>
    %40 = vector.shape_cast %36 : vector<8x32xf32> to vector<1x8x32xf32>
    %41 = vector.shape_cast %37 : vector<8x32xf32> to vector<1x8x32xf32>
    %42 = vector.shape_cast %38 : vector<8x32xf32> to vector<1x8x32xf32>
    %43 = vector.shape_cast %39 : vector<8x32xf32> to vector<1x8x32xf32>
    %44 = tpu.concatenate %40, %41, %42, %43 in 0 : vector<1x8x32xf32>, vector<1x8x32xf32>, vector<1x8x32xf32>, vector<1x8x32xf32> -> vector<4x8x32xf32>
    %45 = vector.extract_strided_slice %26 {offsets = [0, 0], sizes = [8, 32], strides = [1, 1]} : vector<8x128xf32> to vector<8x32xf32>
    %46 = vector.extract_strided_slice %26 {offsets = [0, 32], sizes = [8, 32], strides = [1, 1]} : vector<8x128xf32> to vector<8x32xf32>
    %47 = vector.extract_strided_slice %26 {offsets = [0, 64], sizes = [8, 32], strides = [1, 1]} : vector<8x128xf32> to vector<8x32xf32>
    %48 = vector.extract_strided_slice %26 {offsets = [0, 96], sizes = [8, 32], strides = [1, 1]} : vector<8x128xf32> to vector<8x32xf32>
    %49 = vector.shape_cast %45 : vector<8x32xf32> to vector<1x8x32xf32>
    %50 = vector.shape_cast %46 : vector<8x32xf32> to vector<1x8x32xf32>
    %51 = vector.shape_cast %47 : vector<8x32xf32> to vector<1x8x32xf32>
    %52 = vector.shape_cast %48 : vector<8x32xf32> to vector<1x8x32xf32>
    %53 = tpu.concatenate %49, %50, %51, %52 in 0 : vector<1x8x32xf32>, vector<1x8x32xf32>, vector<1x8x32xf32>, vector<1x8x32xf32> -> vector<4x8x32xf32>
    "tpu.trace_start"() <{level = 10 : i32, message = "hqd,hkd->hqk"}> : () -> ()
    %cst_22 = arith.constant dense<0.000000e+00> : vector<4x8x8xf32>
    %54 = tpu.matmul %35, %44, %cst_22 {dimension_numbers = #tpu.dot_dimension_numbers<[2], [2], [1], [1], [0, 0, 0, 1, 1, 1], [0], [0]>} : vector<4x8x32xf32>, vector<4x8x32xf32>, vector<4x8x8xf32> -> vector<4x8x8xf32>
    "tpu.trace_stop"() : () -> ()
    %cst_23 = arith.constant dense<0xFF800000> : vector<4x8xf32>
    %55 = vector.multi_reduction <maximumf>, %54, %cst_23 [2] : vector<4x8x8xf32> to vector<4x8xf32>
    %56 = vector.shape_cast %55 : vector<4x8xf32> to vector<4x8x1xf32>
    %57 = vector.broadcast %56 : vector<4x8x1xf32> to vector<4x8x8xf32>
    %58 = arith.subf %54, %57 : vector<4x8x8xf32>
    %59 = math.exp %58 : vector<4x8x8xf32>
    %cst_24 = arith.constant dense<0.000000e+00> : vector<4x8xf32>
    %60 = vector.multi_reduction <add>, %59, %cst_24 [2] : vector<4x8x8xf32> to vector<4x8xf32>
    %61 = vector.shape_cast %60 : vector<4x8xf32> to vector<4x8x1xf32>
    "tpu.trace_start"() <{level = 10 : i32, message = "hqk,hkd->hqd"}> : () -> ()
    %cst_25 = arith.constant dense<0.000000e+00> : vector<4x8x32xf32>
    %62 = tpu.matmul %59, %53, %cst_25 {dimension_numbers = #tpu.dot_dimension_numbers<[2], [1], [1], [2], [0, 0, 0, 1, 1, 2], [0], [0]>} : vector<4x8x8xf32>, vector<4x8x32xf32>, vector<4x8x32xf32> -> vector<4x8x32xf32>
    "tpu.trace_stop"() : () -> ()
    %63 = tpu.reciprocal %61 : vector<4x8x1xf32> -> vector<4x8x1xf32>
    %64 = vector.broadcast %63 : vector<4x8x1xf32> to vector<4x8x32xf32>
    %65 = arith.mulf %62, %64 : vector<4x8x32xf32>
    %66 = vector.extract_strided_slice %65 {offsets = [0, 0, 0], sizes = [1, 8, 32], strides = [1, 1, 1]} : vector<4x8x32xf32> to vector<1x8x32xf32>
    %67 = vector.shape_cast %66 : vector<1x8x32xf32> to vector<8x32xf32>
    %68 = vector.extract_strided_slice %65 {offsets = [1, 0, 0], sizes = [1, 8, 32], strides = [1, 1, 1]} : vector<4x8x32xf32> to vector<1x8x32xf32>
    %69 = vector.shape_cast %68 : vector<1x8x32xf32> to vector<8x32xf32>
    %70 = vector.extract_strided_slice %65 {offsets = [2, 0, 0], sizes = [1, 8, 32], strides = [1, 1, 1]} : vector<4x8x32xf32> to vector<1x8x32xf32>
    %71 = vector.shape_cast %70 : vector<1x8x32xf32> to vector<8x32xf32>
    %72 = vector.extract_strided_slice %65 {offsets = [3, 0, 0], sizes = [1, 8, 32], strides = [1, 1, 1]} : vector<4x8x32xf32> to vector<1x8x32xf32>
    %73 = vector.shape_cast %72 : vector<1x8x32xf32> to vector<8x32xf32>
    %74 = tpu.concatenate %67, %69, %71, %73 in 1 : vector<8x32xf32>, vector<8x32xf32>, vector<8x32xf32>, vector<8x32xf32> -> vector<8x128xf32>
    %c0_26 = arith.constant 0 : index
    %c0_27 = arith.constant 0 : index
    %75 = vector.load %arg10[%c0_26, %c0_27] : memref<128x32xf32, #tpu.memory_space<vmem>>, vector<128x32xf32>
    %cst_28 = arith.constant dense<0.000000e+00> : vector<8x32xf32>
    %76 = tpu.matmul %74, %75, %cst_28 {dimension_numbers = #tpu.dot_dimension_numbers<[1], [0], [0], [1], [0, 0, 1, 1], [], []>} : vector<8x128xf32>, vector<128x32xf32>, vector<8x32xf32> -> vector<8x32xf32>
    %c0_29 = arith.constant 0 : index
    %c0_30 = arith.constant 0 : index
    %77 = vector.load %arg11[%c0_29, %c0_30] : memref<1x32xf32, #tpu.memory_space<vmem>>, vector<1x32xf32>
    %78 = vector.shape_cast %77 : vector<1x32xf32> to vector<32xf32>
    %79 = vector.shape_cast %78 : vector<32xf32> to vector<1x32xf32>
    %80 = vector.broadcast %79 : vector<1x32xf32> to vector<8x32xf32>
    %81 = arith.addf %76, %80 : vector<8x32xf32>
    %c0_31 = arith.constant 0 : index
    %c0_32 = arith.constant 0 : index
    %c0_33 = arith.constant 0 : index
    %82 = vector.load %arg12[%c0_31, %c0_32, %c0_33] : memref<1x8x32xf32, #tpu.memory_space<vmem>>, vector<1x8x32xf32>
    %83 = vector.shape_cast %82 : vector<1x8x32xf32> to vector<8x32xf32>
    %84 = vector.shape_cast %81 : vector<8x32xf32> to vector<1x8x32xf32>
    tpu.vector_store %arg12[%c0_31, %c0_32, %c0_33], %84 {strides = array<i32>} : memref<1x8x32xf32, #tpu.memory_space<vmem>>, vector<1x8x32xf32>,
    return
  }
  func.func @transform_0(%arg0: i32) -> (i32, i32, i32) {
    %c0_i32 = arith.constant 0 : i32
    %c0_i32_0 = arith.constant 0 : i32
    %c0_i32_1 = arith.constant 0 : i32
    return %arg0, %c0_i32, %c0_i32_0 : i32, i32, i32
  }
  func.func @transform_1(%arg0: i32) -> (i32, i32, i32) {
    %c0_i32 = arith.constant 0 : i32
    %c0_i32_0 = arith.constant 0 : i32
    %c0_i32_1 = arith.constant 0 : i32
    return %arg0, %c0_i32, %c0_i32_0 : i32, i32, i32
  }
  func.func @transform_2(%arg0: i32) -> (i32, i32, i32) {
    %c0_i32 = arith.constant 0 : i32
    %c0_i32_0 = arith.constant 0 : i32
    %c0_i32_1 = arith.constant 0 : i32
    return %arg0, %c0_i32, %c0_i32_0 : i32, i32, i32
  }
  func.func @transform_3(%arg0: i32) -> (i32, i32) {
    %c0_i32 = arith.constant 0 : i32
    %c0_i32_0 = arith.constant 0 : i32
    %c0_i32_1 = arith.constant 0 : i32
    return %c0_i32, %c0_i32_0 : i32, i32
  }
  func.func @transform_4(%arg0: i32) -> (i32, i32) {
    %c0_i32 = arith.constant 0 : i32
    %c0_i32_0 = arith.constant 0 : i32
    %c0_i32_1 = arith.constant 0 : i32
    return %c0_i32, %c0_i32_0 : i32, i32
  }
  func.func @transform_5(%arg0: i32) -> (i32, i32) {
    %c0_i32 = arith.constant 0 : i32
    %c0_i32_0 = arith.constant 0 : i32
    %c0_i32_1 = arith.constant 0 : i32
    return %c0_i32, %c0_i32_0 : i32, i32
  }
  func.func @transform_6(%arg0: i32) -> (i32, i32) {
    %c0_i32 = arith.constant 0 : i32
    %c0_i32_0 = arith.constant 0 : i32
    %c0_i32_1 = arith.constant 0 : i32
    return %c0_i32, %c0_i32_0 : i32, i32
  }
  func.func @transform_7(%arg0: i32) -> (i32, i32) {
    %c0_i32 = arith.constant 0 : i32
    %c0_i32_0 = arith.constant 0 : i32
    %c0_i32_1 = arith.constant 0 : i32
    return %c0_i32, %c0_i32_0 : i32, i32
  }
  func.func @transform_8(%arg0: i32) -> (i32, i32) {
    %c0_i32 = arith.constant 0 : i32
    %c0_i32_0 = arith.constant 0 : i32
    %c0_i32_1 = arith.constant 0 : i32
    return %c0_i32, %c0_i32_0 : i32, i32
  }
  func.func @transform_9(%arg0: i32) -> (i32, i32) {
    %c0_i32 = arith.constant 0 : i32
    %c0_i32_0 = arith.constant 0 : i32
    %c0_i32_1 = arith.constant 0 : i32
    return %c0_i32, %c0_i32_0 : i32, i32
  }
  func.func @transform_10(%arg0: i32) -> (i32, i32) {
    %c0_i32 = arith.constant 0 : i32
    %c0_i32_0 = arith.constant 0 : i32
    %c0_i32_1 = arith.constant 0 : i32
    return %c0_i32, %c0_i32_0 : i32, i32
  }
  func.func @transform_11(%arg0: i32) -> (i32, i32, i32) {
    %c0_i32 = arith.constant 0 : i32
    %c0_i32_0 = arith.constant 0 : i32
    %c0_i32_1 = arith.constant 0 : i32
    return %arg0, %c0_i32, %c0_i32_0 : i32, i32, i32
  }
}

</mosaic_0001>

<llo_original>
// kernel: multi_head_attention.1
$region0: #{multi_head_attention.1}
  #allocation0 [shape = 'u32[]', space=smem, size = 0x4, offset = 0x4, fixed_abs, tag = 'smem constant byte address 0x4 - core index']
  #allocation1 [shape = 'u32[144,128]{1,0:T(1,128)}', space=vmem, size = 0x12000, scoped, tag = 'internal scratch']
  %s0 = inlined_call_operand.vmem [shape: f32[2,8,16], index: 0, kind: input, shape index: {}]
  %s1 = inlined_call_operand.vmem [shape: f32[2,8,16], index: 1, kind: input, shape index: {}]
  %s2 = inlined_call_operand.vmem [shape: f32[2,8,16], index: 2, kind: input, shape index: {}]
  %s3 = inlined_call_operand.vmem [shape: f32[16,128], index: 3, kind: input, shape index: {}]
  %s4 = inlined_call_operand.vmem [shape: f32[1,128], index: 4, kind: input, shape index: {}]
  %s5 = inlined_call_operand.vmem [shape: f32[16,128], index: 5, kind: input, shape index: {}]
  %s6 = inlined_call_operand.vmem [shape: f32[1,128], index: 6, kind: input, shape index: {}]
  %s7 = inlined_call_operand.vmem [shape: f32[16,128], index: 7, kind: input, shape index: {}]
  %s8 = inlined_call_operand.vmem [shape: f32[1,128], index: 8, kind: input, shape index: {}]
  %s9 = inlined_call_operand.vmem [shape: f32[128,32], index: 9, kind: input, shape index: {}]
  %s10 = inlined_call_operand.vmem [shape: f32[1,32], index: 10, kind: input, shape index: {}]
  %s11 = inlined_call_operand.hbm [shape: f32[2,8,32], index: 11, kind: output, shape index: {}]
  %s12 = sld [smem:[#allocation0]]
  $region77: #{multi_head_attention.1} parent=0
    _
  %s14 = ssub.s32 1, %s12
  %s15 = scalar_select 0, %s14, %s12
  $region1: #{multi_head_attention.1} parent=0
    #allocation2 [shape = 'u8[8192]{0}', space=vmem, size = 0x2000, scoped, tag = 'output window, operand 0']
    #allocation3 [shape = 's32[2]{0}', space=sflag, size = 0x8, scoped, tag = 'scoped memory for multi_head_attention.1']
    %16 = vsyncpa [#allocation3], 0
    %s17 = scalar_lea.sflag [#allocation3], 1
    %18 = vsyncpa %s17, 0
    loop: start=0, step=1, limit=4
    $region2: #{multi_head_attention.1} parent=1 // loop_pre_header
      _
    $region3: #{multi_head_attention.1} parent=1 // loop_header
      %s20 = sphi 0, %s24
      %p21 = scmp.ge.s32.totalorder %s20, 4
      %s30 = sphi 0, %s32
      %s33 = sphi 0, %s30
      %s34 = sphi 0, %s33
      %s50 = sphi 0, %s34
      %s56 = sphi 0, %s58
      %s59 = sphi 0, %s56
      %s60 = sphi 0, %s59
      %s76 = sphi 0, %s60
      %s82 = sphi 0, %s84
      %s85 = sphi 0, %s82
      %s86 = sphi 0, %s85
      %s102 = sphi 0, %s86
      %s106 = sphi 0, %s106
      %s108 = sphi 0, %s106
      %s109 = sphi 0, %s108
      %s123 = sphi 0, %s109
      %s127 = sphi 0, %s127
      %s129 = sphi 0, %s127
      %s130 = sphi 0, %s129
      %s144 = sphi 0, %s130
      %s148 = sphi 0, %s148
      %s150 = sphi 0, %s148
      %s151 = sphi 0, %s150
      %s165 = sphi 0, %s151
      %s169 = sphi 0, %s169
      %s171 = sphi 0, %s169
      %s172 = sphi 0, %s171
      %s186 = sphi 0, %s172
      %s190 = sphi 0, %s190
      %s192 = sphi 0, %s190
      %s193 = sphi 0, %s192
      %s207 = sphi 0, %s193
      %s211 = sphi 0, %s211
      %s213 = sphi 0, %s211
      %s214 = sphi 0, %s213
      %s228 = sphi 0, %s214
      %s232 = sphi 0, %s232
      %s234 = sphi 0, %s232
      %s235 = sphi 0, %s234
      %s249 = sphi 0, %s235
      %s253 = sphi 0, %s253
      %s255 = sphi 0, %s253
      %s256 = sphi 0, %s255
      %s270 = sphi 0, %s256
      %s276 = sphi 0, %s278
      %s279 = sphi 0, %s276
      %s280 = sphi 0, %s279
      %s296 = sphi 0, %s280
    $region4: #{multi_head_attention.1} parent=1 // loop_header_branch
      %23 = sbr.rel (%p21) target = $region8
    $region5: #{multi_head_attention.1} parent=1 // loop_body
      %s25 = ssub.s32 %s20, 1
      %s26 = ssub.s32 %s20, 2
      %s27 = sadd.s32 %s20, 1
      %s28 = ssub.s32 %s20, %s27
      %p29 = scmp.eq.s32.totalorder %s28, 0
      %s31 = sadd.s32 %s30, 1
      %s32 = scalar_select %p29, %s30, %s31
      %p35 = pneg %p29
      %p36 = scmp.eq.s32.totalorder %s20, 1
      %p37 = por %p35, %p36
      %p38 = scmp.ne.s32.totalorder %s30, %s33
      %p39 = scmp.eq.s32.totalorder %s20, 0
      %p40 = por %p38, %p39
      %p41 = scmp.ne.s32.totalorder %s30, %s33
      %p42 = scmp.eq.s32.totalorder %s25, 1
      %p43 = por %p41, %p42
      %p44 = scmp.ne.s32.totalorder %s33, %s34
      %p45 = scmp.eq.s32.totalorder %s25, 0
      %p46 = por %p44, %p45
      %p47 = scmp.ne.s32.totalorder %s33, %s34
      %p48 = scmp.eq.s32.totalorder %s26, 1
      %p49 = por %p47, %p48
      %p51 = scmp.ne.s32.totalorder %s34, %s50
      %p52 = scmp.eq.s32.totalorder %s26, 0
      %p53 = por %p51, %p52
      %s54 = ssub.s32 %s20, %s27
      %p55 = scmp.eq.s32.totalorder %s54, 0
      %s57 = sadd.s32 %s56, 1
      %s58 = scalar_select %p55, %s56, %s57
      %p61 = pneg %p55
      %p62 = scmp.eq.s32.totalorder %s20, 1
      %p63 = por %p61, %p62
      %p64 = scmp.ne.s32.totalorder %s56, %s59
      %p65 = scmp.eq.s32.totalorder %s20, 0
      %p66 = por %p64, %p65
      %p67 = scmp.ne.s32.totalorder %s56, %s59
      %p68 = scmp.eq.s32.totalorder %s25, 1
      %p69 = por %p67, %p68
      %p70 = scmp.ne.s32.totalorder %s59, %s60
      %p71 = scmp.eq.s32.totalorder %s25, 0
      %p72 = por %p70, %p71
      %p73 = scmp.ne.s32.totalorder %s59, %s60
      %p74 = scmp.eq.s32.totalorder %s26, 1
      %p75 = por %p73, %p74
      %p77 = scmp.ne.s32.totalorder %s60, %s76
      %p78 = scmp.eq.s32.totalorder %s26, 0
      %p79 = por %p77, %p78
      %s80 = ssub.s32 %s20, %s27
      %p81 = scmp.eq.s32.totalorder %s80, 0
      %s83 = sadd.s32 %s82, 1
      %s84 = scalar_select %p81, %s82, %s83
      %p87 = pneg %p81
      %p88 = scmp.eq.s32.totalorder %s20, 1
      %p89 = por %p87, %p88
      %p90 = scmp.ne.s32.totalorder %s82, %s85
      %p91 = scmp.eq.s32.totalorder %s20, 0
      %p92 = por %p90, %p91
      %p93 = scmp.ne.s32.totalorder %s82, %s85
      %p94 = scmp.eq.s32.totalorder %s25, 1
      %p95 = por %p93, %p94
      %p96 = scmp.ne.s32.totalorder %s85, %s86
      %p97 = scmp.eq.s32.totalorder %s25, 0
      %p98 = por %p96, %p97
      %p99 = scmp.ne.s32.totalorder %s85, %s86
      %p100 = scmp.eq.s32.totalorder %s26, 1
      %p101 = por %p99, %p100
      %p103 = scmp.ne.s32.totalorder %s86, %s102
      %p104 = scmp.eq.s32.totalorder %s26, 0
      %p105 = por %p103, %p104
      %s107 = sadd.s32 %s106, 1
      %p110 = scmp.eq.s32.totalorder %s20, 1
      %p111 = scmp.ne.s32.totalorder %s106, %s108
      %p112 = scmp.eq.s32.totalorder %s20, 0
      %p113 = por %p111, %p112
      %p114 = scmp.ne.s32.totalorder %s106, %s108
      %p115 = scmp.eq.s32.totalorder %s25, 1
      %p116 = por %p114, %p115
      %p117 = scmp.ne.s32.totalorder %s108, %s109
      %p118 = scmp.eq.s32.totalorder %s25, 0
      %p119 = por %p117, %p118
      %p120 = scmp.ne.s32.totalorder %s108, %s109
      %p121 = scmp.eq.s32.totalorder %s26, 1
      %p122 = por %p120, %p121
      %p124 = scmp.ne.s32.totalorder %s109, %s123
      %p125 = scmp.eq.s32.totalorder %s26, 0
      %p126 = por %p124, %p125
      %s128 = sadd.s32 %s127, 1
      %p131 = scmp.eq.s32.totalorder %s20, 1
      %p132 = scmp.ne.s32.totalorder %s127, %s129
      %p133 = scmp.eq.s32.totalorder %s20, 0
      %p134 = por %p132, %p133
      %p135 = scmp.ne.s32.totalorder %s127, %s129
      %p136 = scmp.eq.s32.totalorder %s25, 1
      %p137 = por %p135, %p136
      %p138 = scmp.ne.s32.totalorder %s129, %s130
      %p139 = scmp.eq.s32.totalorder %s25, 0
      %p140 = por %p138, %p139
      %p141 = scmp.ne.s32.totalorder %s129, %s130
      %p142 = scmp.eq.s32.totalorder %s26, 1
      %p143 = por %p141, %p142
      %p145 = scmp.ne.s32.totalorder %s130, %s144
      %p146 = scmp.eq.s32.totalorder %s26, 0
      %p147 = por %p145, %p146
      %s149 = sadd.s32 %s148, 1
      %p152 = scmp.eq.s32.totalorder %s20, 1
      %p153 = scmp.ne.s32.totalorder %s148, %s150
      %p154 = scmp.eq.s32.totalorder %s20, 0
      %p155 = por %p153, %p154
      %p156 = scmp.ne.s32.totalorder %s148, %s150
      %p157 = scmp.eq.s32.totalorder %s25, 1
      %p158 = por %p156, %p157
      %p159 = scmp.ne.s32.totalorder %s150, %s151
      %p160 = scmp.eq.s32.totalorder %s25, 0
      %p161 = por %p159, %p160
      %p162 = scmp.ne.s32.totalorder %s150, %s151
      %p163 = scmp.eq.s32.totalorder %s26, 1
      %p164 = por %p162, %p163
      %p166 = scmp.ne.s32.totalorder %s151, %s165
      %p167 = scmp.eq.s32.totalorder %s26, 0
      %p168 = por %p166, %p167
      %s170 = sadd.s32 %s169, 1
      %p173 = scmp.eq.s32.totalorder %s20, 1
      %p174 = scmp.ne.s32.totalorder %s169, %s171
      %p175 = scmp.eq.s32.totalorder %s20, 0
      %p176 = por %p174, %p175
      %p177 = scmp.ne.s32.totalorder %s169, %s171
      %p178 = scmp.eq.s32.totalorder %s25, 1
      %p179 = por %p177, %p178
      %p180 = scmp.ne.s32.totalorder %s171, %s172
      %p181 = scmp.eq.s32.totalorder %s25, 0
      %p182 = por %p180, %p181
      %p183 = scmp.ne.s32.totalorder %s171, %s172
      %p184 = scmp.eq.s32.totalorder %s26, 1
      %p185 = por %p183, %p184
      %p187 = scmp.ne.s32.totalorder %s172, %s186
      %p188 = scmp.eq.s32.totalorder %s26, 0
      %p189 = por %p187, %p188
      %s191 = sadd.s32 %s190, 1
      %p194 = scmp.eq.s32.totalorder %s20, 1
      %p195 = scmp.ne.s32.totalorder %s190, %s192
      %p196 = scmp.eq.s32.totalorder %s20, 0
      %p197 = por %p195, %p196
      %p198 = scmp.ne.s32.totalorder %s190, %s192
      %p199 = scmp.eq.s32.totalorder %s25, 1
      %p200 = por %p198, %p199
      %p201 = scmp.ne.s32.totalorder %s192, %s193
      %p202 = scmp.eq.s32.totalorder %s25, 0
      %p203 = por %p201, %p202
      %p204 = scmp.ne.s32.totalorder %s192, %s193
      %p205 = scmp.eq.s32.totalorder %s26, 1
      %p206 = por %p204, %p205
      %p208 = scmp.ne.s32.totalorder %s193, %s207
      %p209 = scmp.eq.s32.totalorder %s26, 0
      %p210 = por %p208, %p209
      %s212 = sadd.s32 %s211, 1
      %p215 = scmp.eq.s32.totalorder %s20, 1
      %p216 = scmp.ne.s32.totalorder %s211, %s213
      %p217 = scmp.eq.s32.totalorder %s20, 0
      %p218 = por %p216, %p217
      %p219 = scmp.ne.s32.totalorder %s211, %s213
      %p220 = scmp.eq.s32.totalorder %s25, 1
      %p221 = por %p219, %p220
      %p222 = scmp.ne.s32.totalorder %s213, %s214
      %p223 = scmp.eq.s32.totalorder %s25, 0
      %p224 = por %p222, %p223
      %p225 = scmp.ne.s32.totalorder %s213, %s214
      %p226 = scmp.eq.s32.totalorder %s26, 1
      %p227 = por %p225, %p226
      %p229 = scmp.ne.s32.totalorder %s214, %s228
      %p230 = scmp.eq.s32.totalorder %s26, 0
      %p231 = por %p229, %p230
      %s233 = sadd.s32 %s232, 1
      %p236 = scmp.eq.s32.totalorder %s20, 1
      %p237 = scmp.ne.s32.totalorder %s232, %s234
      %p238 = scmp.eq.s32.totalorder %s20, 0
      %p239 = por %p237, %p238
      %p240 = scmp.ne.s32.totalorder %s232, %s234
      %p241 = scmp.eq.s32.totalorder %s25, 1
      %p242 = por %p240, %p241
      %p243 = scmp.ne.s32.totalorder %s234, %s235
      %p244 = scmp.eq.s32.totalorder %s25, 0
      %p245 = por %p243, %p244
      %p246 = scmp.ne.s32.totalorder %s234, %s235
      %p247 = scmp.eq.s32.totalorder %s26, 1
      %p248 = por %p246, %p247
      %p250 = scmp.ne.s32.totalorder %s235, %s249
      %p251 = scmp.eq.s32.totalorder %s26, 0
      %p252 = por %p250, %p251
      %s254 = sadd.s32 %s253, 1
      %p257 = scmp.eq.s32.totalorder %s20, 1
      %p258 = scmp.ne.s32.totalorder %s253, %s255
      %p259 = scmp.eq.s32.totalorder %s20, 0
      %p260 = por %p258, %p259
      %p261 = scmp.ne.s32.totalorder %s253, %s255
      %p262 = scmp.eq.s32.totalorder %s25, 1
      %p263 = por %p261, %p262
      %p264 = scmp.ne.s32.totalorder %s255, %s256
      %p265 = scmp.eq.s32.totalorder %s25, 0
      %p266 = por %p264, %p265
      %p267 = scmp.ne.s32.totalorder %s255, %s256
      %p268 = scmp.eq.s32.totalorder %s26, 1
      %p269 = por %p267, %p268
      %p271 = scmp.ne.s32.totalorder %s256, %s270
      %p272 = scmp.eq.s32.totalorder %s26, 0
      %p273 = por %p271, %p272
      %s274 = ssub.s32 %s20, %s27
      %p275 = scmp.eq.s32.totalorder %s274, 0
      %s277 = sadd.s32 %s276, 1
      %s278 = scalar_select %p275, %s276, %s277
      %p281 = pneg %p275
      %p282 = scmp.eq.s32.totalorder %s20, 1
      %p283 = por %p281, %p282
      %p284 = scmp.ne.s32.totalorder %s276, %s279
      %p285 = scmp.eq.s32.totalorder %s20, 0
      %p286 = por %p284, %p285
      %p287 = scmp.ne.s32.totalorder %s276, %s279
      %p288 = scmp.eq.s32.totalorder %s25, 1
      %p289 = por %p287, %p288
      %p290 = scmp.ne.s32.totalorder %s279, %s280
      %p291 = scmp.eq.s32.totalorder %s25, 0
      %p292 = por %p290, %p291
      %p293 = scmp.ne.s32.totalorder %s279, %s280
      %p294 = scmp.eq.s32.totalorder %s26, 1
      %p295 = por %p293, %p294
      %p297 = scmp.ne.s32.totalorder %s280, %s296
      %p298 = scmp.eq.s32.totalorder %s26, 0
      %p299 = por %p297, %p298
      %p300 = scmp.le.s32.totalorder 1, %s20
      %p301 = scmp.lt.s32.totalorder %s20, 3
      %p302 = pnand %p300, %p301
      %p303 = pneg %p302
      // Predicated region
      $region9: #{multi_head_attention.1} parent=5 // pred_check
        _
      $region10: #{multi_head_attention.1} parent=5 // pred_check_branch
        %305 = sbr.rel (%p302) target = $region12
      $region11: #{multi_head_attention.1} parent=5 // pred_region
        %s306 = ssub.s32 %s20, 1
        // Predicated region
        $region13: #{multi_head_attention.1} parent=11 // pred_check
          %p307 = pneg %p119
        $region14: #{multi_head_attention.1} parent=11 // pred_check_branch
          %309 = sbr.rel (%p307) target = $region16
        $region15: #{multi_head_attention.1} parent=11 // pred_region
          _
        $region16: #{multi_head_attention.1} parent=11 // pred_fallthru
          _
        // Predicated region
        $region17: #{multi_head_attention.1} parent=11 // pred_check
          %p310 = pneg %p140
        $region18: #{multi_head_attention.1} parent=11 // pred_check_branch
          %312 = sbr.rel (%p310) target = $region20
        $region19: #{multi_head_attention.1} parent=11 // pred_region
          _
        $region20: #{multi_head_attention.1} parent=11 // pred_fallthru
          _
        // Predicated region
        $region21: #{multi_head_attention.1} parent=11 // pred_check
          %p313 = pneg %p161
        $region22: #{multi_head_attention.1} parent=11 // pred_check_branch
          %315 = sbr.rel (%p313) target = $region24
        $region23: #{multi_head_attention.1} parent=11 // pred_region
          _
        $region24: #{multi_head_attention.1} parent=11 // pred_fallthru
          _
        // Predicated region
        $region25: #{multi_head_attention.1} parent=11 // pred_check
          %p316 = pneg %p182
        $region26: #{multi_head_attention.1} parent=11 // pred_check_branch
          %318 = sbr.rel (%p316) target = $region28
        $region27: #{multi_head_attention.1} parent=11 // pred_region
          _
        $region28: #{multi_head_attention.1} parent=11 // pred_fallthru
          _
        // Predicated region
        $region29: #{multi_head_attention.1} parent=11 // pred_check
          %p319 = pneg %p203
        $region30: #{multi_head_attention.1} parent=11 // pred_check_branch
          %321 = sbr.rel (%p319) target = $region32
        $region31: #{multi_head_attention.1} parent=11 // pred_region
          _
        $region32: #{multi_head_attention.1} parent=11 // pred_fallthru
          _
        // Predicated region
        $region33: #{multi_head_attention.1} parent=11 // pred_check
          %p322 = pneg %p224
        $region34: #{multi_head_attention.1} parent=11 // pred_check_branch
          %324 = sbr.rel (%p322) target = $region36
        $region35: #{multi_head_attention.1} parent=11 // pred_region
          _
        $region36: #{multi_head_attention.1} parent=11 // pred_fallthru
          _
        // Predicated region
        $region37: #{multi_head_attention.1} parent=11 // pred_check
          %p325 = pneg %p245
        $region38: #{multi_head_attention.1} parent=11 // pred_check_branch
          %327 = sbr.rel (%p325) target = $region40
        $region39: #{multi_head_attention.1} parent=11 // pred_region
          _
        $region40: #{multi_head_attention.1} parent=11 // pred_fallthru
          _
        // Predicated region
        $region41: #{multi_head_attention.1} parent=11 // pred_check
          %p328 = pneg %p266
        $region42: #{multi_head_attention.1} parent=11 // pred_check_branch
          %330 = sbr.rel (%p328) target = $region44
        $region43: #{multi_head_attention.1} parent=11 // pred_region
          _
        $region44: #{multi_head_attention.1} parent=11 // pred_fallthru
          _
      $region12: #{multi_head_attention.1} parent=5 // pred_fallthru
        _
      %p331 = scmp.lt.s32.totalorder %s20, 2
      // Predicated region
      $region45: #{multi_head_attention.1} parent=5 // pred_check
        %p332 = pneg %p331
      $region46: #{multi_head_attention.1} parent=5 // pred_check_branch
        %334 = sbr.rel (%p332) target = $region48
      $region47: #{multi_head_attention.1} parent=5 // pred_region
        // Predicated region
        $region49: #{multi_head_attention.1} parent=47 // pred_check
          %p335 = pneg %p40
        $region50: #{multi_head_attention.1} parent=47 // pred_check_branch
          %337 = sbr.rel (%p335) target = $region52
        $region51: #{multi_head_attention.1} parent=47 // pred_region
          %p338 = scmp.lt.s32.totalorder %s20, 1
          %s339 = scalar_select %p338, %s20, 1
          %s340 = smul.addr %s339, 8
          %s341 = scalar_lea.vmem %s0, %s340
        $region52: #{multi_head_attention.1} parent=47 // pred_fallthru
          _
        // Predicated region
        $region53: #{multi_head_attention.1} parent=47 // pred_check
          %p342 = pneg %p66
        $region54: #{multi_head_attention.1} parent=47 // pred_check_branch
          %344 = sbr.rel (%p342) target = $region56
        $region55: #{multi_head_attention.1} parent=47 // pred_region
          %p345 = scmp.lt.s32.totalorder %s20, 1
          %s346 = scalar_select %p345, %s20, 1
          %s347 = smul.addr %s346, 8
          %s348 = scalar_lea.vmem %s1, %s347
        $region56: #{multi_head_attention.1} parent=47 // pred_fallthru
          _
        // Predicated region
        $region57: #{multi_head_attention.1} parent=47 // pred_check
          %p349 = pneg %p92
        $region58: #{multi_head_attention.1} parent=47 // pred_check_branch
          %351 = sbr.rel (%p349) target = $region60
        $region59: #{multi_head_attention.1} parent=47 // pred_region
          %p352 = scmp.lt.s32.totalorder %s20, 1
          %s353 = scalar_select %p352, %s20, 1
          %s354 = smul.addr %s353, 8
          %s355 = scalar_lea.vmem %s2, %s354
        $region60: #{multi_head_attention.1} parent=47 // pred_fallthru
          _
      $region48: #{multi_head_attention.1} parent=5 // pred_fallthru
        _
      %p356 = scmp.le.s32.totalorder 1, %s20
      %p357 = scmp.lt.s32.totalorder %s20, 3
      %p358 = pnand %p356, %p357
      %p359 = pneg %p358
      // Predicated region
      $region61: #{multi_head_attention.1} parent=5 // pred_check
        _
      $region62: #{multi_head_attention.1} parent=5 // pred_check_branch
        %361 = sbr.rel (%p358) target = $region64
      $region63: #{multi_head_attention.1} parent=5 // pred_region
        %s362 = ssub.s32 %s20, 1
        %p363 = scmp.lt.s32.totalorder %s25, 1
        %s364 = scalar_select %p363, %s25, 1
        %s365 = smul.addr %s364, 8
        %s366 = scalar_lea.vmem %s0, %s365
        %p367 = pneg %p46
        %p368 = pneg %p43
        %p369 = scmp.lt.s32.totalorder %s25, 1
        %s370 = scalar_select %p369, %s25, 1
        %s371 = smul.addr %s370, 8
        %s372 = scalar_lea.vmem %s1, %s371
        %p373 = pneg %p72
        %p374 = pneg %p69
        %p375 = scmp.lt.s32.totalorder %s25, 1
        %s376 = scalar_select %p375, %s25, 1
        %s377 = smul.addr %s376, 8
        %s378 = scalar_lea.vmem %s2, %s377
        %p379 = pneg %p98
        %p380 = pneg %p95
        %p381 = pneg %p119
        %p382 = pneg %p116
        %p383 = pneg %p140
        %p384 = pneg %p137
        %p385 = pneg %p161
        %p386 = pneg %p158
        %p387 = pneg %p182
        %p388 = pneg %p179
        %p389 = pneg %p203
        %p390 = pneg %p200
        %p391 = pneg %p224
        %p392 = pneg %p221
        %p393 = pneg %p245
        %p394 = pneg %p242
        %p395 = pneg %p266
        %p396 = pneg %p263
        %p397 = pneg %p292
        %p398 = pneg %p289
        %s399 = sand.u32 %s279, 1
        %s400 = scalar_lea.sflag [#allocation3], %s399
        %s401 = sand.u32 %s279, 1
        %s402 = smul.addr %s401, 8
        %s403 = scalar_lea.vmem [#allocation2], %s402
        %p404 = scmp.lt.s32.totalorder %s25, 1
        %s405 = scalar_select %p404, %s25, 1
        %s406 = smul.addr %s405, 8
        %s407 = scalar_lea.vmem %s0, %s406
        %p408 = scmp.lt.s32.totalorder %s25, 1
        %s409 = scalar_select %p408, %s25, 1
        %s410 = smul.addr %s409, 8
        %s411 = scalar_lea.vmem %s1, %s410
        %p412 = scmp.lt.s32.totalorder %s25, 1
        %s413 = scalar_select %p412, %s25, 1
        %s414 = smul.addr %s413, 8
        %s415 = scalar_lea.vmem %s2, %s414
        %v416 = vld [vmem:[%s407] sm:$0xff]
        %v417 = vld [vmem:[%s411] sm:$0xff]
        %v418 = vld [vmem:[%s415] sm:$0xff]
        %v419 = vld [vmem:[%s3] sm:$0xff]
        %v420 = vld [vmem:[%s3 + $0x8] sm:$0xff]
        %v421 = vld [vmem:[%s4] sm:$0x1]
        %v423 = vlaneseq
        %v424 = vshrl.u32 %v423, 7
        %v425 = vsub.s32 0, %v424
        %v426 = vrot.slane %v421, %v425
        %vm428 = vcmask 130048
        %v430 = vsel %vm428, %v416, 0
        %432 = vmatprep.subr.mxu0 0.0
        %433 = vmatpush1.msra.mxu0 %v419
        %434 = vmatprep.subr.mxu0 0.0
        %435 = vmatpush1.msra.mxu0 %v420
        %436 = vmatprep.subr.mxu0 0.0
        %437 = vmatpush1.msra.mxu0 0.0
        %438 = vmatprep.subr.mxu0 0.0
        %439 = vmatpush1.msra.mxu0 0.0
        %440 = vmatprep.subr.mxu0 0.0
        %441 = vmatpush1.msra.mxu0 0.0
        %442 = vmatprep.subr.mxu0 0.0
        %443 = vmatpush1.msra.mxu0 0.0
        %444 = vmatprep.subr.mxu0 0.0
        %445 = vmatpush1.msra.mxu0 0.0
        %446 = vmatprep.subr.mxu0 0.0
        %447 = vmatpush1.msra.mxu0 0.0
        %448 = vmatprep.subr.mxu0 0.0
        %449 = vmatpush1.msra.mxu0 0.0
        %450 = vmatprep.subr.mxu0 0.0
        %451 = vmatpush1.msra.mxu0 0.0
        %452 = vmatprep.subr.mxu0 0.0
        %453 = vmatpush1.msra.mxu0 0.0
        %454 = vmatprep.subr.mxu0 0.0
        %455 = vmatpush1.msra.mxu0 0.0
        %456 = vmatprep.subr.mxu0 0.0
        %457 = vmatpush1.msra.mxu0 0.0
        %458 = vmatprep.subr.mxu0 0.0
        %459 = vmatpush1.msra.mxu0 0.0
        %460 = vmatprep.subr.mxu0 0.0
        %461 = vmatpush1.msra.mxu0 0.0
        %462 = vmatprep.subr.mxu0 0.0
        %463 = vmatpush1.msra.mxu0 0.0
        %464 = vmatprep.subr.mxu0 0.0
        %465 = vmatpush1.msra.mxu0 0.0
        %466 = vmatprep.subr.mxu0 0.0
        %467 = vmatpush1.msra.mxu0 0.0
        %468 = vmatprep.subr.mxu0 0.0
        %469 = vmatpush1.msra.mxu0 0.0
        %470 = vmatprep.subr.mxu0 0.0
        %471 = vmatpush1.msra.mxu0 0.0
        %472 = vmatprep.subr.mxu0 0.0
        %473 = vmatpush1.msra.mxu0 0.0
        %474 = vmatprep.subr.mxu0 0.0
        %475 = vmatpush1.msra.mxu0 0.0
        %476 = vmatprep.subr.mxu0 0.0
        %477 = vmatpush1.msra.mxu0 0.0
        %478 = vmatprep.subr.mxu0 0.0
        %479 = vmatpush1.msra.mxu0 0.0
        %480 = vmatprep.subr.mxu0 0.0
        %481 = vmatpush1.msra.mxu0 0.0
        %482 = vmatprep.subr.mxu0 0.0
        %483 = vmatpush1.msra.mxu0 0.0
        %484 = vmatprep.subr.mxu0 0.0
        %485 = vmatpush1.msra.mxu0 0.0
        %486 = vmatprep.subr.mxu0 0.0
        %487 = vmatpush1.msra.mxu0 0.0
        %488 = vmatprep.subr.mxu0 0.0
        %489 = vmatpush1.msra.mxu0 0.0
        %490 = vmatprep.subr.mxu0 0.0
        %491 = vmatpush1.msra.mxu0 0.0
        %492 = vmatprep.subr.mxu0 0.0
        %493 = vmatpush1.msra.mxu0 0.0
        %494 = vmatprep.subr.mxu0 0.0
        %495 = vmatpush1.msra.mxu0 0.0
        %496 = vmatprep.mubr.f32.mxu0 0.0
        %497 = vmatmul.mubr.f32.gmra.mrb[0].mxu0 %v430
        %v498 = vpop.f32.mrb[0].mxu0
        %v499 = vadd.f32 %v426, %v498
        %v500 = vpop.f32.mrb[0].mxu0
        %501 = vdwg.mxu0
        %v502 = vld [vmem:[%s5] sm:$0xff]
        %v503 = vld [vmem:[%s5 + $0x8] sm:$0xff]
        %v504 = vld [vmem:[%s6] sm:$0x1]
        %v506 = vlaneseq
        %v507 = vshrl.u32 %v506, 7
        %v508 = vsub.s32 0, %v507
        %v509 = vrot.slane %v504, %v508
        %v512 = vsel %vm428, %v417, 0
        %514 = vmatprep.subr.mxu0 0.0
        %515 = vmatpush1.msra.mxu0 %v502
        %516 = vmatprep.subr.mxu0 0.0
        %517 = vmatpush1.msra.mxu0 %v503
        %518 = vmatprep.subr.mxu0 0.0
        %519 = vmatpush1.msra.mxu0 0.0
        %520 = vmatprep.subr.mxu0 0.0
        %521 = vmatpush1.msra.mxu0 0.0
        %522 = vmatprep.subr.mxu0 0.0
        %523 = vmatpush1.msra.mxu0 0.0
        %524 = vmatprep.subr.mxu0 0.0
        %525 = vmatpush1.msra.mxu0 0.0
        %526 = vmatprep.subr.mxu0 0.0
        %527 = vmatpush1.msra.mxu0 0.0
        %528 = vmatprep.subr.mxu0 0.0
        %529 = vmatpush1.msra.mxu0 0.0
        %530 = vmatprep.subr.mxu0 0.0
        %531 = vmatpush1.msra.mxu0 0.0
        %532 = vmatprep.subr.mxu0 0.0
        %533 = vmatpush1.msra.mxu0 0.0
        %534 = vmatprep.subr.mxu0 0.0
        %535 = vmatpush1.msra.mxu0 0.0
        %536 = vmatprep.subr.mxu0 0.0
        %537 = vmatpush1.msra.mxu0 0.0
        %538 = vmatprep.subr.mxu0 0.0
        %539 = vmatpush1.msra.mxu0 0.0
        %540 = vmatprep.subr.mxu0 0.0
        %541 = vmatpush1.msra.mxu0 0.0
        %542 = vmatprep.subr.mxu0 0.0
        %543 = vmatpush1.msra.mxu0 0.0
        %544 = vmatprep.subr.mxu0 0.0
        %545 = vmatpush1.msra.mxu0 0.0
        %546 = vmatprep.subr.mxu0 0.0
        %547 = vmatpush1.msra.mxu0 0.0
        %548 = vmatprep.subr.mxu0 0.0
        %549 = vmatpush1.msra.mxu0 0.0
        %550 = vmatprep.subr.mxu0 0.0
        %551 = vmatpush1.msra.mxu0 0.0
        %552 = vmatprep.subr.mxu0 0.0
        %553 = vmatpush1.msra.mxu0 0.0
        %554 = vmatprep.subr.mxu0 0.0
        %555 = vmatpush1.msra.mxu0 0.0
        %556 = vmatprep.subr.mxu0 0.0
        %557 = vmatpush1.msra.mxu0 0.0
        %558 = vmatprep.subr.mxu0 0.0
        %559 = vmatpush1.msra.mxu0 0.0
        %560 = vmatprep.subr.mxu0 0.0
        %561 = vmatpush1.msra.mxu0 0.0
        %562 = vmatprep.subr.mxu0 0.0
        %563 = vmatpush1.msra.mxu0 0.0
        %564 = vmatprep.subr.mxu0 0.0
        %565 = vmatpush1.msra.mxu0 0.0
        %566 = vmatprep.subr.mxu0 0.0
        %567 = vmatpush1.msra.mxu0 0.0
        %568 = vmatprep.subr.mxu0 0.0
        %569 = vmatpush1.msra.mxu0 0.0
        %570 = vmatprep.subr.mxu0 0.0
        %571 = vmatpush1.msra.mxu0 0.0
        %572 = vmatprep.subr.mxu0 0.0
        %573 = vmatpush1.msra.mxu0 0.0
        %574 = vmatprep.subr.mxu0 0.0
        %575 = vmatpush1.msra.mxu0 0.0
        %576 = vmatprep.subr.mxu0 0.0
        %577 = vmatpush1.msra.mxu0 0.0
        %578 = vmatprep.mubr.f32.mxu0 0.0
        %579 = vmatmul.mubr.f32.gmra.mrb[0].mxu0 %v512
        %v580 = vpop.f32.mrb[0].mxu0
        %v581 = vadd.f32 %v509, %v580
        %v582 = vpop.f32.mrb[0].mxu0
        %583 = vdwg.mxu0
        %v584 = vld [vmem:[%s7] sm:$0xff]
        %v585 = vld [vmem:[%s7 + $0x8] sm:$0xff]
        %v586 = vld [vmem:[%s8] sm:$0x1]
        %v588 = vlaneseq
        %v589 = vshrl.u32 %v588, 7
        %v590 = vsub.s32 0, %v589
        %v591 = vrot.slane %v586, %v590
        %v594 = vsel %vm428, %v418, 0
        %596 = vmatprep.subr.mxu0 0.0
        %597 = vmatpush1.msra.mxu0 %v584
        %598 = vmatprep.subr.mxu0 0.0
        %599 = vmatpush1.msra.mxu0 %v585
        %600 = vmatprep.subr.mxu0 0.0
        %601 = vmatpush1.msra.mxu0 0.0
        %602 = vmatprep.subr.mxu0 0.0
        %603 = vmatpush1.msra.mxu0 0.0
        %604 = vmatprep.subr.mxu0 0.0
        %605 = vmatpush1.msra.mxu0 0.0
        %606 = vmatprep.subr.mxu0 0.0
        %607 = vmatpush1.msra.mxu0 0.0
        %608 = vmatprep.subr.mxu0 0.0
        %609 = vmatpush1.msra.mxu0 0.0
        %610 = vmatprep.subr.mxu0 0.0
        %611 = vmatpush1.msra.mxu0 0.0
        %612 = vmatprep.subr.mxu0 0.0
        %613 = vmatpush1.msra.mxu0 0.0
        %614 = vmatprep.subr.mxu0 0.0
        %615 = vmatpush1.msra.mxu0 0.0
        %616 = vmatprep.subr.mxu0 0.0
        %617 = vmatpush1.msra.mxu0 0.0
        %618 = vmatprep.subr.mxu0 0.0
        %619 = vmatpush1.msra.mxu0 0.0
        %620 = vmatprep.subr.mxu0 0.0
        %621 = vmatpush1.msra.mxu0 0.0
        %622 = vmatprep.subr.mxu0 0.0
        %623 = vmatpush1.msra.mxu0 0.0
        %624 = vmatprep.subr.mxu0 0.0
        %625 = vmatpush1.msra.mxu0 0.0
        %626 = vmatprep.subr.mxu0 0.0
        %627 = vmatpush1.msra.mxu0 0.0
        %628 = vmatprep.subr.mxu0 0.0
        %629 = vmatpush1.msra.mxu0 0.0
        %630 = vmatprep.subr.mxu0 0.0
        %631 = vmatpush1.msra.mxu0 0.0
        %632 = vmatprep.subr.mxu0 0.0
        %633 = vmatpush1.msra.mxu0 0.0
        %634 = vmatprep.subr.mxu0 0.0
        %635 = vmatpush1.msra.mxu0 0.0
        %636 = vmatprep.subr.mxu0 0.0
        %637 = vmatpush1.msra.mxu0 0.0
        %638 = vmatprep.subr.mxu0 0.0
        %639 = vmatpush1.msra.mxu0 0.0
        %640 = vmatprep.subr.mxu0 0.0
        %641 = vmatpush1.msra.mxu0 0.0
        %642 = vmatprep.subr.mxu0 0.0
        %643 = vmatpush1.msra.mxu0 0.0
        %644 = vmatprep.subr.mxu0 0.0
        %645 = vmatpush1.msra.mxu0 0.0
        %646 = vmatprep.subr.mxu0 0.0
        %647 = vmatpush1.msra.mxu0 0.0
        %648 = vmatprep.subr.mxu0 0.0
        %649 = vmatpush1.msra.mxu0 0.0
        %650 = vmatprep.subr.mxu0 0.0
        %651 = vmatpush1.msra.mxu0 0.0
        %652 = vmatprep.subr.mxu0 0.0
        %653 = vmatpush1.msra.mxu0 0.0
        %654 = vmatprep.subr.mxu0 0.0
        %655 = vmatpush1.msra.mxu0 0.0
        %656 = vmatprep.subr.mxu0 0.0
        %657 = vmatpush1.msra.mxu0 0.0
        %658 = vmatprep.subr.mxu0 0.0
        %659 = vmatpush1.msra.mxu0 0.0
        %660 = vmatprep.mubr.f32.mxu0 0.0
        %661 = vmatmul.mubr.f32.gmra.mrb[0].mxu0 %v594
        %v662 = vpop.f32.mrb[0].mxu0
        %v663 = vadd.f32 %v591, %v662
        %v664 = vpop.f32.mrb[0].mxu0
        %665 = vdwg.mxu0
        %667 = vrot.lane.b32.xlu0 %v499, 96
        %v668 = vpop.permute.xlu0 %667
        %669 = vrot.lane.b32.xlu0 %v499, 64
        %v670 = vpop.permute.xlu0 %669
        %671 = vrot.lane.b32.xlu0 %v499, 32
        %v672 = vpop.permute.xlu0 %671
        %674 = vrot.lane.b32.xlu0 %v581, 96
        %v675 = vpop.permute.xlu0 %674
        %676 = vrot.lane.b32.xlu0 %v581, 64
        %v677 = vpop.permute.xlu0 %676
        %678 = vrot.lane.b32.xlu0 %v581, 32
        %v679 = vpop.permute.xlu0 %678
        %681 = vrot.lane.b32.xlu0 %v663, 96
        %v682 = vpop.permute.xlu0 %681
        %684 = vrot.lane.b32.xlu0 %v663, 64
        %v685 = vpop.permute.xlu0 %684
        %687 = vrot.lane.b32.xlu0 %v663, 32
        %v688 = vpop.permute.xlu0 %687
        %vm690 = vcmask 261120
        %v691 = vsel %vm690, %v499, 0
        %v693 = vsel %vm690, %v581, 0
        %695 = vmatprep.subr.mxu0 0.0
        %696 = vmatpush1.xpose.msra.mxu0 %v693
        %697 = vmatprep.subr.mxu0 0.0
        %698 = vmatpush1.xpose.msra.mxu0 0.0
        %699 = vmatprep.subr.mxu0 0.0
        %700 = vmatpush1.xpose.msra.mxu0 0.0
        %701 = vmatprep.subr.mxu0 0.0
        %702 = vmatpush1.xpose.msra.mxu0 0.0
        %703 = vmatprep.subr.mxu0 0.0
        %704 = vmatpush1.xpose.msra.mxu0 0.0
        %705 = vmatprep.subr.mxu0 0.0
        %706 = vmatpush1.xpose.msra.mxu0 0.0
        %707 = vmatprep.subr.mxu0 0.0
        %708 = vmatpush1.xpose.msra.mxu0 0.0
        %709 = vmatprep.subr.mxu0 0.0
        %710 = vmatpush1.xpose.msra.mxu0 0.0
        %711 = vmatprep.subr.mxu0 0.0
        %712 = vmatpush1.xpose.msra.mxu0 0.0
        %713 = vmatprep.subr.mxu0 0.0
        %714 = vmatpush1.xpose.msra.mxu0 0.0
        %715 = vmatprep.subr.mxu0 0.0
        %716 = vmatpush1.xpose.msra.mxu0 0.0
        %717 = vmatprep.subr.mxu0 0.0
        %718 = vmatpush1.xpose.msra.mxu0 0.0
        %719 = vmatprep.subr.mxu0 0.0
        %720 = vmatpush1.xpose.msra.mxu0 0.0
        %721 = vmatprep.subr.mxu0 0.0
        %722 = vmatpush1.xpose.msra.mxu0 0.0
        %723 = vmatprep.subr.mxu0 0.0
        %724 = vmatpush1.xpose.msra.mxu0 0.0
        %725 = vmatprep.subr.mxu0 0.0
        %726 = vmatpush1.xpose.msra.mxu0 0.0
        %727 = vmatprep.subr.mxu0 0.0
        %728 = vmatpush1.xpose.msra.mxu0 0.0
        %729 = vmatprep.subr.mxu0 0.0
        %730 = vmatpush1.xpose.msra.mxu0 0.0
        %731 = vmatprep.subr.mxu0 0.0
        %732 = vmatpush1.xpose.msra.mxu0 0.0
        %733 = vmatprep.subr.mxu0 0.0
        %734 = vmatpush1.xpose.msra.mxu0 0.0
        %735 = vmatprep.subr.mxu0 0.0
        %736 = vmatpush1.xpose.msra.mxu0 0.0
        %737 = vmatprep.subr.mxu0 0.0
        %738 = vmatpush1.xpose.msra.mxu0 0.0
        %739 = vmatprep.subr.mxu0 0.0
        %740 = vmatpush1.xpose.msra.mxu0 0.0
        %741 = vmatprep.subr.mxu0 0.0
        %742 = vmatpush1.xpose.msra.mxu0 0.0
        %743 = vmatprep.subr.mxu0 0.0
        %744 = vmatpush1.xpose.msra.mxu0 0.0
        %745 = vmatprep.subr.mxu0 0.0
        %746 = vmatpush1.xpose.msra.mxu0 0.0
        %747 = vmatprep.subr.mxu0 0.0
        %748 = vmatpush1.xpose.msra.mxu0 0.0
        %749 = vmatprep.subr.mxu0 0.0
        %750 = vmatpush1.xpose.msra.mxu0 0.0
        %751 = vmatprep.subr.mxu0 0.0
        %752 = vmatpush1.xpose.msra.mxu0 0.0
        %753 = vmatprep.subr.mxu0 0.0
        %754 = vmatpush1.xpose.msra.mxu0 0.0
        %755 = vmatprep.subr.mxu0 0.0
        %756 = vmatpush1.xpose.msra.mxu0 0.0
        %757 = vmatprep.subr.mxu0 0.0
        %758 = vmatpush1.xpose.msra.mxu0 0.0
        %759 = vmatprep.mubr.f32.mxu0 0.0
        %760 = vmatmul.mubr.f32.gmra.mrb[0].mxu0 %v691
        %v761 = vpop.f32.mrb[0].mxu0
        %v762 = vadd.f32 0.0, %v761
        %v763 = vpop.f32.mrb[0].mxu0
        %764 = vdwg.mxu0
        %v765 = vsel %vm690, %v668, 0
        %v767 = vsel %vm690, %v675, 0
        %769 = vmatprep.subr.mxu0 0.0
        %770 = vmatpush1.xpose.msra.mxu0 %v767
        %771 = vmatprep.subr.mxu0 0.0
        %772 = vmatpush1.xpose.msra.mxu0 0.0
        %773 = vmatprep.subr.mxu0 0.0
        %774 = vmatpush1.xpose.msra.mxu0 0.0
        %775 = vmatprep.subr.mxu0 0.0
        %776 = vmatpush1.xpose.msra.mxu0 0.0
        %777 = vmatprep.subr.mxu0 0.0
        %778 = vmatpush1.xpose.msra.mxu0 0.0
        %779 = vmatprep.subr.mxu0 0.0
        %780 = vmatpush1.xpose.msra.mxu0 0.0
        %781 = vmatprep.subr.mxu0 0.0
        %782 = vmatpush1.xpose.msra.mxu0 0.0
        %783 = vmatprep.subr.mxu0 0.0
        %784 = vmatpush1.xpose.msra.mxu0 0.0
        %785 = vmatprep.subr.mxu0 0.0
        %786 = vmatpush1.xpose.msra.mxu0 0.0
        %787 = vmatprep.subr.mxu0 0.0
        %788 = vmatpush1.xpose.msra.mxu0 0.0
        %789 = vmatprep.subr.mxu0 0.0
        %790 = vmatpush1.xpose.msra.mxu0 0.0
        %791 = vmatprep.subr.mxu0 0.0
        %792 = vmatpush1.xpose.msra.mxu0 0.0
        %793 = vmatprep.subr.mxu0 0.0
        %794 = vmatpush1.xpose.msra.mxu0 0.0
        %795 = vmatprep.subr.mxu0 0.0
        %796 = vmatpush1.xpose.msra.mxu0 0.0
        %797 = vmatprep.subr.mxu0 0.0
        %798 = vmatpush1.xpose.msra.mxu0 0.0
        %799 = vmatprep.subr.mxu0 0.0
        %800 = vmatpush1.xpose.msra.mxu0 0.0
        %801 = vmatprep.subr.mxu0 0.0
        %802 = vmatpush1.xpose.msra.mxu0 0.0
        %803 = vmatprep.subr.mxu0 0.0
        %804 = vmatpush1.xpose.msra.mxu0 0.0
        %805 = vmatprep.subr.mxu0 0.0
        %806 = vmatpush1.xpose.msra.mxu0 0.0
        %807 = vmatprep.subr.mxu0 0.0
        %808 = vmatpush1.xpose.msra.mxu0 0.0
        %809 = vmatprep.subr.mxu0 0.0
        %810 = vmatpush1.xpose.msra.mxu0 0.0
        %811 = vmatprep.subr.mxu0 0.0
        %812 = vmatpush1.xpose.msra.mxu0 0.0
        %813 = vmatprep.subr.mxu0 0.0
        %814 = vmatpush1.xpose.msra.mxu0 0.0
        %815 = vmatprep.subr.mxu0 0.0
        %816 = vmatpush1.xpose.msra.mxu0 0.0
        %817 = vmatprep.subr.mxu0 0.0
        %818 = vmatpush1.xpose.msra.mxu0 0.0
        %819 = vmatprep.subr.mxu0 0.0
        %820 = vmatpush1.xpose.msra.mxu0 0.0
        %821 = vmatprep.subr.mxu0 0.0
        %822 = vmatpush1.xpose.msra.mxu0 0.0
        %823 = vmatprep.subr.mxu0 0.0
        %824 = vmatpush1.xpose.msra.mxu0 0.0
        %825 = vmatprep.subr.mxu0 0.0
        %826 = vmatpush1.xpose.msra.mxu0 0.0
        %827 = vmatprep.subr.mxu0 0.0
        %828 = vmatpush1.xpose.msra.mxu0 0.0
        %829 = vmatprep.subr.mxu0 0.0
        %830 = vmatpush1.xpose.msra.mxu0 0.0
        %831 = vmatprep.subr.mxu0 0.0
        %832 = vmatpush1.xpose.msra.mxu0 0.0
        %833 = vmatprep.mubr.f32.mxu0 0.0
        %834 = vmatmul.mubr.f32.gmra.mrb[0].mxu0 %v765
        %v835 = vpop.f32.mrb[0].mxu0
        %v836 = vadd.f32 0.0, %v835
        %v837 = vpop.f32.mrb[0].mxu0
        %838 = vdwg.mxu0
        %v839 = vsel %vm690, %v670, 0
        %v841 = vsel %vm690, %v677, 0
        %843 = vmatprep.subr.mxu0 0.0
        %844 = vmatpush1.xpose.msra.mxu0 %v841
        %845 = vmatprep.subr.mxu0 0.0
        %846 = vmatpush1.xpose.msra.mxu0 0.0
        %847 = vmatprep.subr.mxu0 0.0
        %848 = vmatpush1.xpose.msra.mxu0 0.0
        %849 = vmatprep.subr.mxu0 0.0
        %850 = vmatpush1.xpose.msra.mxu0 0.0
        %851 = vmatprep.subr.mxu0 0.0
        %852 = vmatpush1.xpose.msra.mxu0 0.0
        %853 = vmatprep.subr.mxu0 0.0
        %854 = vmatpush1.xpose.msra.mxu0 0.0
        %855 = vmatprep.subr.mxu0 0.0
        %856 = vmatpush1.xpose.msra.mxu0 0.0
        %857 = vmatprep.subr.mxu0 0.0
        %858 = vmatpush1.xpose.msra.mxu0 0.0
        %859 = vmatprep.subr.mxu0 0.0
        %860 = vmatpush1.xpose.msra.mxu0 0.0
        %861 = vmatprep.subr.mxu0 0.0
        %862 = vmatpush1.xpose.msra.mxu0 0.0
        %863 = vmatprep.subr.mxu0 0.0
        %864 = vmatpush1.xpose.msra.mxu0 0.0
        %865 = vmatprep.subr.mxu0 0.0
        %866 = vmatpush1.xpose.msra.mxu0 0.0
        %867 = vmatprep.subr.mxu0 0.0
        %868 = vmatpush1.xpose.msra.mxu0 0.0
        %869 = vmatprep.subr.mxu0 0.0
        %870 = vmatpush1.xpose.msra.mxu0 0.0
        %871 = vmatprep.subr.mxu0 0.0
        %872 = vmatpush1.xpose.msra.mxu0 0.0
        %873 = vmatprep.subr.mxu0 0.0
        %874 = vmatpush1.xpose.msra.mxu0 0.0
        %875 = vmatprep.subr.mxu0 0.0
        %876 = vmatpush1.xpose.msra.mxu0 0.0
        %877 = vmatprep.subr.mxu0 0.0
        %878 = vmatpush1.xpose.msra.mxu0 0.0
        %879 = vmatprep.subr.mxu0 0.0
        %880 = vmatpush1.xpose.msra.mxu0 0.0
        %881 = vmatprep.subr.mxu0 0.0
        %882 = vmatpush1.xpose.msra.mxu0 0.0
        %883 = vmatprep.subr.mxu0 0.0
        %884 = vmatpush1.xpose.msra.mxu0 0.0
        %885 = vmatprep.subr.mxu0 0.0
        %886 = vmatpush1.xpose.msra.mxu0 0.0
        %887 = vmatprep.subr.mxu0 0.0
        %888 = vmatpush1.xpose.msra.mxu0 0.0
        %889 = vmatprep.subr.mxu0 0.0
        %890 = vmatpush1.xpose.msra.mxu0 0.0
        %891 = vmatprep.subr.mxu0 0.0
        %892 = vmatpush1.xpose.msra.mxu0 0.0
        %893 = vmatprep.subr.mxu0 0.0
        %894 = vmatpush1.xpose.msra.mxu0 0.0
        %895 = vmatprep.subr.mxu0 0.0
        %896 = vmatpush1.xpose.msra.mxu0 0.0
        %897 = vmatprep.subr.mxu0 0.0
        %898 = vmatpush1.xpose.msra.mxu0 0.0
        %899 = vmatprep.subr.mxu0 0.0
        %900 = vmatpush1.xpose.msra.mxu0 0.0
        %901 = vmatprep.subr.mxu0 0.0
        %902 = vmatpush1.xpose.msra.mxu0 0.0
        %903 = vmatprep.subr.mxu0 0.0
        %904 = vmatpush1.xpose.msra.mxu0 0.0
        %905 = vmatprep.subr.mxu0 0.0
        %906 = vmatpush1.xpose.msra.mxu0 0.0
        %907 = vmatprep.mubr.f32.mxu0 0.0
        %908 = vmatmul.mubr.f32.gmra.mrb[0].mxu0 %v839
        %v909 = vpop.f32.mrb[0].mxu0
        %v910 = vadd.f32 0.0, %v909
        %v911 = vpop.f32.mrb[0].mxu0
        %912 = vdwg.mxu0
        %v913 = vsel %vm690, %v672, 0
        %v915 = vsel %vm690, %v679, 0
        %917 = vmatprep.subr.mxu0 0.0
        %918 = vmatpush1.xpose.msra.mxu0 %v915
        %919 = vmatprep.subr.mxu0 0.0
        %920 = vmatpush1.xpose.msra.mxu0 0.0
        %921 = vmatprep.subr.mxu0 0.0
        %922 = vmatpush1.xpose.msra.mxu0 0.0
        %923 = vmatprep.subr.mxu0 0.0
        %924 = vmatpush1.xpose.msra.mxu0 0.0
        %925 = vmatprep.subr.mxu0 0.0
        %926 = vmatpush1.xpose.msra.mxu0 0.0
        %927 = vmatprep.subr.mxu0 0.0
        %928 = vmatpush1.xpose.msra.mxu0 0.0
        %929 = vmatprep.subr.mxu0 0.0
        %930 = vmatpush1.xpose.msra.mxu0 0.0
        %931 = vmatprep.subr.mxu0 0.0
        %932 = vmatpush1.xpose.msra.mxu0 0.0
        %933 = vmatprep.subr.mxu0 0.0
        %934 = vmatpush1.xpose.msra.mxu0 0.0
        %935 = vmatprep.subr.mxu0 0.0
        %936 = vmatpush1.xpose.msra.mxu0 0.0
        %937 = vmatprep.subr.mxu0 0.0
        %938 = vmatpush1.xpose.msra.mxu0 0.0
        %939 = vmatprep.subr.mxu0 0.0
        %940 = vmatpush1.xpose.msra.mxu0 0.0
        %941 = vmatprep.subr.mxu0 0.0
        %942 = vmatpush1.xpose.msra.mxu0 0.0
        %943 = vmatprep.subr.mxu0 0.0
        %944 = vmatpush1.xpose.msra.mxu0 0.0
        %945 = vmatprep.subr.mxu0 0.0
        %946 = vmatpush1.xpose.msra.mxu0 0.0
        %947 = vmatprep.subr.mxu0 0.0
        %948 = vmatpush1.xpose.msra.mxu0 0.0
        %949 = vmatprep.subr.mxu0 0.0
        %950 = vmatpush1.xpose.msra.mxu0 0.0
        %951 = vmatprep.subr.mxu0 0.0
        %952 = vmatpush1.xpose.msra.mxu0 0.0
        %953 = vmatprep.subr.mxu0 0.0
        %954 = vmatpush1.xpose.msra.mxu0 0.0
        %955 = vmatprep.subr.mxu0 0.0
        %956 = vmatpush1.xpose.msra.mxu0 0.0
        %957 = vmatprep.subr.mxu0 0.0
        %958 = vmatpush1.xpose.msra.mxu0 0.0
        %959 = vmatprep.subr.mxu0 0.0
        %960 = vmatpush1.xpose.msra.mxu0 0.0
        %961 = vmatprep.subr.mxu0 0.0
        %962 = vmatpush1.xpose.msra.mxu0 0.0
        %963 = vmatprep.subr.mxu0 0.0
        %964 = vmatpush1.xpose.msra.mxu0 0.0
        %965 = vmatprep.subr.mxu0 0.0
        %966 = vmatpush1.xpose.msra.mxu0 0.0
        %967 = vmatprep.subr.mxu0 0.0
        %968 = vmatpush1.xpose.msra.mxu0 0.0
        %969 = vmatprep.subr.mxu0 0.0
        %970 = vmatpush1.xpose.msra.mxu0 0.0
        %971 = vmatprep.subr.mxu0 0.0
        %972 = vmatpush1.xpose.msra.mxu0 0.0
        %973 = vmatprep.subr.mxu0 0.0
        %974 = vmatpush1.xpose.msra.mxu0 0.0
        %975 = vmatprep.subr.mxu0 0.0
        %976 = vmatpush1.xpose.msra.mxu0 0.0
        %977 = vmatprep.subr.mxu0 0.0
        %978 = vmatpush1.xpose.msra.mxu0 0.0
        %979 = vmatprep.subr.mxu0 0.0
        %980 = vmatpush1.xpose.msra.mxu0 0.0
        %981 = vmatprep.mubr.f32.mxu0 0.0
        %982 = vmatmul.mubr.f32.gmra.mrb[0].mxu0 %v913
        %v983 = vpop.f32.mrb[0].mxu0
        %v984 = vadd.f32 0.0, %v983
        %v985 = vpop.f32.mrb[0].mxu0
        %986 = vdwg.mxu0
        %vm987 = vcmask 64512
        %v988 = vsel %vm987, %v762, -inf
        %989 = vmax.xlane.f32.xlu0 %v988
        %v990 = vpop.xlane.xlu0 %989
        %v991 = vsel %vm987, %v836, -inf
        %992 = vmax.xlane.f32.xlu0 %v991
        %v993 = vpop.xlane.xlu0 %992
        %v994 = vsel %vm987, %v910, -inf
        %995 = vmax.xlane.f32.xlu0 %v994
        %v996 = vpop.xlane.xlu0 %995
        %v997 = vsel %vm987, %v984, -inf
        %998 = vmax.xlane.f32.xlu0 %v997
        %v999 = vpop.xlane.xlu0 %998
        %v1000 = vsub.f32 %v762, %v990
        %v1001 = vsub.f32 %v836, %v993
        %v1002 = vsub.f32 %v910, %v996
        %v1003 = vsub.f32 %v984, %v999
        %v1004 = vmul.f32 %v1000, 1.442695
        %v1005 = vpow.pop %v1004
        %v1006 = vmul.f32 %v1001, 1.442695
        %v1007 = vpow.pop %v1006
        %v1008 = vmul.f32 %v1002, 1.442695
        %v1009 = vpow.pop %v1008
        %v1010 = vmul.f32 %v1003, 1.442695
        %v1011 = vpow.pop %v1010
        %v1012 = vsel %vm987, %v1005, 0.0
        %1013 = vadd.xlane.f32.xlu0 %v1012
        %v1014 = vpop.xlane.xlu0 %1013
        %v1015 = vsel %vm987, %v1007, 0.0
        %1016 = vadd.xlane.f32.xlu0 %v1015
        %v1017 = vpop.xlane.xlu0 %1016
        %v1018 = vsel %vm987, %v1009, 0.0
        %1019 = vadd.xlane.f32.xlu0 %v1018
        %v1020 = vpop.xlane.xlu0 %1019
        %v1021 = vsel %vm987, %v1011, 0.0
        %1022 = vadd.xlane.f32.xlu0 %v1021
        %v1023 = vpop.xlane.xlu0 %1022
        %v1025 = vsel %vm987, %v1005, 0
        %1027 = vmatprep.subr.mxu0 0.0
        %1028 = vmatpush1.msra.mxu0 %v663
        %1029 = vmatprep.subr.mxu0 0.0
        %1030 = vmatpush1.msra.mxu0 0.0
        %1031 = vmatprep.subr.mxu0 0.0
        %1032 = vmatpush1.msra.mxu0 0.0
        %1033 = vmatprep.subr.mxu0 0.0
        %1034 = vmatpush1.msra.mxu0 0.0
        %1035 = vmatprep.subr.mxu0 0.0
        %1036 = vmatpush1.msra.mxu0 0.0
        %1037 = vmatprep.subr.mxu0 0.0
        %1038 = vmatpush1.msra.mxu0 0.0
        %1039 = vmatprep.subr.mxu0 0.0
        %1040 = vmatpush1.msra.mxu0 0.0
        %1041 = vmatprep.subr.mxu0 0.0
        %1042 = vmatpush1.msra.mxu0 0.0
        %1043 = vmatprep.subr.mxu0 0.0
        %1044 = vmatpush1.msra.mxu0 0.0
        %1045 = vmatprep.subr.mxu0 0.0
        %1046 = vmatpush1.msra.mxu0 0.0
        %1047 = vmatprep.subr.mxu0 0.0
        %1048 = vmatpush1.msra.mxu0 0.0
        %1049 = vmatprep.subr.mxu0 0.0
        %1050 = vmatpush1.msra.mxu0 0.0
        %1051 = vmatprep.subr.mxu0 0.0
        %1052 = vmatpush1.msra.mxu0 0.0
        %1053 = vmatprep.subr.mxu0 0.0
        %1054 = vmatpush1.msra.mxu0 0.0
        %1055 = vmatprep.subr.mxu0 0.0
        %1056 = vmatpush1.msra.mxu0 0.0
        %1057 = vmatprep.subr.mxu0 0.0
        %1058 = vmatpush1.msra.mxu0 0.0
        %1059 = vmatprep.subr.mxu0 0.0
        %1060 = vmatpush1.msra.mxu0 0.0
        %1061 = vmatprep.subr.mxu0 0.0
        %1062 = vmatpush1.msra.mxu0 0.0
        %1063 = vmatprep.subr.mxu0 0.0
        %1064 = vmatpush1.msra.mxu0 0.0
        %1065 = vmatprep.subr.mxu0 0.0
        %1066 = vmatpush1.msra.mxu0 0.0
        %1067 = vmatprep.subr.mxu0 0.0
        %1068 = vmatpush1.msra.mxu0 0.0
        %1069 = vmatprep.subr.mxu0 0.0
        %1070 = vmatpush1.msra.mxu0 0.0
        %1071 = vmatprep.subr.mxu0 0.0
        %1072 = vmatpush1.msra.mxu0 0.0
        %1073 = vmatprep.subr.mxu0 0.0
        %1074 = vmatpush1.msra.mxu0 0.0
        %1075 = vmatprep.subr.mxu0 0.0
        %1076 = vmatpush1.msra.mxu0 0.0
        %1077 = vmatprep.subr.mxu0 0.0
        %1078 = vmatpush1.msra.mxu0 0.0
        %1079 = vmatprep.subr.mxu0 0.0
        %1080 = vmatpush1.msra.mxu0 0.0
        %1081 = vmatprep.subr.mxu0 0.0
        %1082 = vmatpush1.msra.mxu0 0.0
        %1083 = vmatprep.subr.mxu0 0.0
        %1084 = vmatpush1.msra.mxu0 0.0
        %1085 = vmatprep.subr.mxu0 0.0
        %1086 = vmatpush1.msra.mxu0 0.0
        %1087 = vmatprep.subr.mxu0 0.0
        %1088 = vmatpush1.msra.mxu0 0.0
        %1089 = vmatprep.subr.mxu0 0.0
        %1090 = vmatpush1.msra.mxu0 0.0
        %1091 = vmatprep.mubr.f32.mxu0 0.0
        %1092 = vmatmul.mubr.f32.gmra.mrb[0].mxu0 %v1025
        %v1093 = vpop.f32.mrb[0].mxu0
        %v1094 = vadd.f32 0.0, %v1093
        %v1095 = vpop.f32.mrb[0].mxu0
        %1096 = vdwg.mxu0
        %v1098 = vsel %vm987, %v1007, 0
        %1100 = vmatprep.subr.mxu0 0.0
        %1101 = vmatpush1.msra.mxu0 %v682
        %1102 = vmatprep.subr.mxu0 0.0
        %1103 = vmatpush1.msra.mxu0 0.0
        %1104 = vmatprep.subr.mxu0 0.0
        %1105 = vmatpush1.msra.mxu0 0.0
        %1106 = vmatprep.subr.mxu0 0.0
        %1107 = vmatpush1.msra.mxu0 0.0
        %1108 = vmatprep.subr.mxu0 0.0
        %1109 = vmatpush1.msra.mxu0 0.0
        %1110 = vmatprep.subr.mxu0 0.0
        %1111 = vmatpush1.msra.mxu0 0.0
        %1112 = vmatprep.subr.mxu0 0.0
        %1113 = vmatpush1.msra.mxu0 0.0
        %1114 = vmatprep.subr.mxu0 0.0
        %1115 = vmatpush1.msra.mxu0 0.0
        %1116 = vmatprep.subr.mxu0 0.0
        %1117 = vmatpush1.msra.mxu0 0.0
        %1118 = vmatprep.subr.mxu0 0.0
        %1119 = vmatpush1.msra.mxu0 0.0
        %1120 = vmatprep.subr.mxu0 0.0
        %1121 = vmatpush1.msra.mxu0 0.0
        %1122 = vmatprep.subr.mxu0 0.0
        %1123 = vmatpush1.msra.mxu0 0.0
        %1124 = vmatprep.subr.mxu0 0.0
        %1125 = vmatpush1.msra.mxu0 0.0
        %1126 = vmatprep.subr.mxu0 0.0
        %1127 = vmatpush1.msra.mxu0 0.0
        %1128 = vmatprep.subr.mxu0 0.0
        %1129 = vmatpush1.msra.mxu0 0.0
        %1130 = vmatprep.subr.mxu0 0.0
        %1131 = vmatpush1.msra.mxu0 0.0
        %1132 = vmatprep.subr.mxu0 0.0
        %1133 = vmatpush1.msra.mxu0 0.0
        %1134 = vmatprep.subr.mxu0 0.0
        %1135 = vmatpush1.msra.mxu0 0.0
        %1136 = vmatprep.subr.mxu0 0.0
        %1137 = vmatpush1.msra.mxu0 0.0
        %1138 = vmatprep.subr.mxu0 0.0
        %1139 = vmatpush1.msra.mxu0 0.0
        %1140 = vmatprep.subr.mxu0 0.0
        %1141 = vmatpush1.msra.mxu0 0.0
        %1142 = vmatprep.subr.mxu0 0.0
        %1143 = vmatpush1.msra.mxu0 0.0
        %1144 = vmatprep.subr.mxu0 0.0
        %1145 = vmatpush1.msra.mxu0 0.0
        %1146 = vmatprep.subr.mxu0 0.0
        %1147 = vmatpush1.msra.mxu0 0.0
        %1148 = vmatprep.subr.mxu0 0.0
        %1149 = vmatpush1.msra.mxu0 0.0
        %1150 = vmatprep.subr.mxu0 0.0
        %1151 = vmatpush1.msra.mxu0 0.0
        %1152 = vmatprep.subr.mxu0 0.0
        %1153 = vmatpush1.msra.mxu0 0.0
        %1154 = vmatprep.subr.mxu0 0.0
        %1155 = vmatpush1.msra.mxu0 0.0
        %1156 = vmatprep.subr.mxu0 0.0
        %1157 = vmatpush1.msra.mxu0 0.0
        %1158 = vmatprep.subr.mxu0 0.0
        %1159 = vmatpush1.msra.mxu0 0.0
        %1160 = vmatprep.subr.mxu0 0.0
        %1161 = vmatpush1.msra.mxu0 0.0
        %1162 = vmatprep.subr.mxu0 0.0
        %1163 = vmatpush1.msra.mxu0 0.0
        %1164 = vmatprep.mubr.f32.mxu0 0.0
        %1165 = vmatmul.mubr.f32.gmra.mrb[0].mxu0 %v1098
        %v1166 = vpop.f32.mrb[0].mxu0
        %v1167 = vadd.f32 0.0, %v1166
        %v1168 = vpop.f32.mrb[0].mxu0
        %1169 = vdwg.mxu0
        %v1171 = vsel %vm987, %v1009, 0
        %1173 = vmatprep.subr.mxu0 0.0
        %1174 = vmatpush1.msra.mxu0 %v685
        %1175 = vmatprep.subr.mxu0 0.0
        %1176 = vmatpush1.msra.mxu0 0.0
        %1177 = vmatprep.subr.mxu0 0.0
        %1178 = vmatpush1.msra.mxu0 0.0
        %1179 = vmatprep.subr.mxu0 0.0
        %1180 = vmatpush1.msra.mxu0 0.0
        %1181 = vmatprep.subr.mxu0 0.0
        %1182 = vmatpush1.msra.mxu0 0.0
        %1183 = vmatprep.subr.mxu0 0.0
        %1184 = vmatpush1.msra.mxu0 0.0
        %1185 = vmatprep.subr.mxu0 0.0
        %1186 = vmatpush1.msra.mxu0 0.0
        %1187 = vmatprep.subr.mxu0 0.0
        %1188 = vmatpush1.msra.mxu0 0.0
        %1189 = vmatprep.subr.mxu0 0.0
        %1190 = vmatpush1.msra.mxu0 0.0
        %1191 = vmatprep.subr.mxu0 0.0
        %1192 = vmatpush1.msra.mxu0 0.0
        %1193 = vmatprep.subr.mxu0 0.0
        %1194 = vmatpush1.msra.mxu0 0.0
        %1195 = vmatprep.subr.mxu0 0.0
        %1196 = vmatpush1.msra.mxu0 0.0
        %1197 = vmatprep.subr.mxu0 0.0
        %1198 = vmatpush1.msra.mxu0 0.0
        %1199 = vmatprep.subr.mxu0 0.0
        %1200 = vmatpush1.msra.mxu0 0.0
        %1201 = vmatprep.subr.mxu0 0.0
        %1202 = vmatpush1.msra.mxu0 0.0
        %1203 = vmatprep.subr.mxu0 0.0
        %1204 = vmatpush1.msra.mxu0 0.0
        %1205 = vmatprep.subr.mxu0 0.0
        %1206 = vmatpush1.msra.mxu0 0.0
        %1207 = vmatprep.subr.mxu0 0.0
        %1208 = vmatpush1.msra.mxu0 0.0
        %1209 = vmatprep.subr.mxu0 0.0
        %1210 = vmatpush1.msra.mxu0 0.0
        %1211 = vmatprep.subr.mxu0 0.0
        %1212 = vmatpush1.msra.mxu0 0.0
        %1213 = vmatprep.subr.mxu0 0.0
        %1214 = vmatpush1.msra.mxu0 0.0
        %1215 = vmatprep.subr.mxu0 0.0
        %1216 = vmatpush1.msra.mxu0 0.0
        %1217 = vmatprep.subr.mxu0 0.0
        %1218 = vmatpush1.msra.mxu0 0.0
        %1219 = vmatprep.subr.mxu0 0.0
        %1220 = vmatpush1.msra.mxu0 0.0
        %1221 = vmatprep.subr.mxu0 0.0
        %1222 = vmatpush1.msra.mxu0 0.0
        %1223 = vmatprep.subr.mxu0 0.0
        %1224 = vmatpush1.msra.mxu0 0.0
        %1225 = vmatprep.subr.mxu0 0.0
        %1226 = vmatpush1.msra.mxu0 0.0
        %1227 = vmatprep.subr.mxu0 0.0
        %1228 = vmatpush1.msra.mxu0 0.0
        %1229 = vmatprep.subr.mxu0 0.0
        %1230 = vmatpush1.msra.mxu0 0.0
        %1231 = vmatprep.subr.mxu0 0.0
        %1232 = vmatpush1.msra.mxu0 0.0
        %1233 = vmatprep.subr.mxu0 0.0
        %1234 = vmatpush1.msra.mxu0 0.0
        %1235 = vmatprep.subr.mxu0 0.0
        %1236 = vmatpush1.msra.mxu0 0.0
        %1237 = vmatprep.mubr.f32.mxu0 0.0
        %1238 = vmatmul.mubr.f32.gmra.mrb[0].mxu0 %v1171
        %v1239 = vpop.f32.mrb[0].mxu0
        %v1240 = vadd.f32 0.0, %v1239
        %v1241 = vpop.f32.mrb[0].mxu0
        %1242 = vdwg.mxu0
        %v1244 = vsel %vm987, %v1011, 0
        %1246 = vmatprep.subr.mxu0 0.0
        %1247 = vmatpush1.msra.mxu0 %v688
        %1248 = vmatprep.subr.mxu0 0.0
        %1249 = vmatpush1.msra.mxu0 0.0
        %1250 = vmatprep.subr.mxu0 0.0
        %1251 = vmatpush1.msra.mxu0 0.0
        %1252 = vmatprep.subr.mxu0 0.0
        %1253 = vmatpush1.msra.mxu0 0.0
        %1254 = vmatprep.subr.mxu0 0.0
        %1255 = vmatpush1.msra.mxu0 0.0
        %1256 = vmatprep.subr.mxu0 0.0
        %1257 = vmatpush1.msra.mxu0 0.0
        %1258 = vmatprep.subr.mxu0 0.0
        %1259 = vmatpush1.msra.mxu0 0.0
        %1260 = vmatprep.subr.mxu0 0.0
        %1261 = vmatpush1.msra.mxu0 0.0
        %1262 = vmatprep.subr.mxu0 0.0
        %1263 = vmatpush1.msra.mxu0 0.0
        %1264 = vmatprep.subr.mxu0 0.0
        %1265 = vmatpush1.msra.mxu0 0.0
        %1266 = vmatprep.subr.mxu0 0.0
        %1267 = vmatpush1.msra.mxu0 0.0
        %1268 = vmatprep.subr.mxu0 0.0
        %1269 = vmatpush1.msra.mxu0 0.0
        %1270 = vmatprep.subr.mxu0 0.0
        %1271 = vmatpush1.msra.mxu0 0.0
        %1272 = vmatprep.subr.mxu0 0.0
        %1273 = vmatpush1.msra.mxu0 0.0
        %1274 = vmatprep.subr.mxu0 0.0
        %1275 = vmatpush1.msra.mxu0 0.0
        %1276 = vmatprep.subr.mxu0 0.0
        %1277 = vmatpush1.msra.mxu0 0.0
        %1278 = vmatprep.subr.mxu0 0.0
        %1279 = vmatpush1.msra.mxu0 0.0
        %1280 = vmatprep.subr.mxu0 0.0
        %1281 = vmatpush1.msra.mxu0 0.0
        %1282 = vmatprep.subr.mxu0 0.0
        %1283 = vmatpush1.msra.mxu0 0.0
        %1284 = vmatprep.subr.mxu0 0.0
        %1285 = vmatpush1.msra.mxu0 0.0
        %1286 = vmatprep.subr.mxu0 0.0
        %1287 = vmatpush1.msra.mxu0 0.0
        %1288 = vmatprep.subr.mxu0 0.0
        %1289 = vmatpush1.msra.mxu0 0.0
        %1290 = vmatprep.subr.mxu0 0.0
        %1291 = vmatpush1.msra.mxu0 0.0
        %1292 = vmatprep.subr.mxu0 0.0
        %1293 = vmatpush1.msra.mxu0 0.0
        %1294 = vmatprep.subr.mxu0 0.0
        %1295 = vmatpush1.msra.mxu0 0.0
        %1296 = vmatprep.subr.mxu0 0.0
        %1297 = vmatpush1.msra.mxu0 0.0
        %1298 = vmatprep.subr.mxu0 0.0
        %1299 = vmatpush1.msra.mxu0 0.0
        %1300 = vmatprep.subr.mxu0 0.0
        %1301 = vmatpush1.msra.mxu0 0.0
        %1302 = vmatprep.subr.mxu0 0.0
        %1303 = vmatpush1.msra.mxu0 0.0
        %1304 = vmatprep.subr.mxu0 0.0
        %1305 = vmatpush1.msra.mxu0 0.0
        %1306 = vmatprep.subr.mxu0 0.0
        %1307 = vmatpush1.msra.mxu0 0.0
        %1308 = vmatprep.subr.mxu0 0.0
        %1309 = vmatpush1.msra.mxu0 0.0
        %1310 = vmatprep.mubr.f32.mxu0 0.0
        %1311 = vmatmul.mubr.f32.gmra.mrb[0].mxu0 %v1244
        %v1312 = vpop.f32.mrb[0].mxu0
        %v1313 = vadd.f32 0.0, %v1312
        %v1314 = vpop.f32.mrb[0].mxu0
        %1315 = vdwg.mxu0
        %v1316 = vrcp.pop %v1014
        %v1317 = vrcp.pop %v1017
        %v1318 = vrcp.pop %v1020
        %v1319 = vrcp.pop %v1023
        %v1320 = vmul.f32 %v1094, %v1316
        %v1321 = vmul.f32 %v1167, %v1317
        %v1322 = vmul.f32 %v1240, %v1318
        %v1323 = vmul.f32 %v1313, %v1319
        %1325 = vrot.lane.b32.xlu0 %v1321, 32
        %v1326 = vpop.permute.xlu0 %1325
        %1329 = vrot.lane.b32.xlu0 %v1322, 64
        %v1330 = vpop.permute.xlu0 %1329
        %1333 = vrot.lane.b32.xlu0 %v1323, 96
        %v1334 = vpop.permute.xlu0 %1333
        %v1336 = vsel %vm690, %v1320, %v1326
        %vm1337 = vcmask 523264
        %v1338 = vsel %vm1337, %v1336, %v1330
        %vm1339 = vcmask 785408
        %v1340 = vsel %vm1339, %v1338, %v1334
        %v1341 = vld [vmem:[%s9] sm:$0xff]
        %v1342 = vld [vmem:[%s9 + $0x8] sm:$0xff]
        %v1343 = vld [vmem:[%s9 + $0x10] sm:$0xff]
        %v1344 = vld [vmem:[%s9 + $0x18] sm:$0xff]
        %v1345 = vld [vmem:[%s9 + $0x20] sm:$0xff]
        %v1346 = vld [vmem:[%s9 + $0x28] sm:$0xff]
        %v1347 = vld [vmem:[%s9 + $0x30] sm:$0xff]
        %v1348 = vld [vmem:[%s9 + $0x38] sm:$0xff]
        %v1349 = vld [vmem:[%s9 + $0x40] sm:$0xff]
        %v1350 = vld [vmem:[%s9 + $0x48] sm:$0xff]
        %v1351 = vld [vmem:[%s9 + $0x50] sm:$0xff]
        %v1352 = vld [vmem:[%s9 + $0x58] sm:$0xff]
        %v1353 = vld [vmem:[%s9 + $0x60] sm:$0xff]
        %v1354 = vld [vmem:[%s9 + $0x68] sm:$0xff]
        %v1355 = vld [vmem:[%s9 + $0x70] sm:$0xff]
        %v1356 = vld [vmem:[%s9 + $0x78] sm:$0xff]
        %v1357 = vld [vmem:[%s10] sm:$0x1]
        %v1359 = vlaneseq
        %v1360 = vshrl.u32 %v1359, 7
        %v1361 = vsub.s32 0, %v1360
        %v1362 = vrot.slane %v1357, %v1361
        %1364 = vmatprep.subr.mxu0 0.0
        %1365 = vmatpush1.msra.mxu0 %v1341
        %1366 = vmatprep.subr.mxu0 0.0
        %1367 = vmatpush1.msra.mxu0 %v1342
        %1368 = vmatprep.subr.mxu0 0.0
        %1369 = vmatpush1.msra.mxu0 %v1343
        %1370 = vmatprep.subr.mxu0 0.0
        %1371 = vmatpush1.msra.mxu0 %v1344
        %1372 = vmatprep.subr.mxu0 0.0
        %1373 = vmatpush1.msra.mxu0 %v1345
        %1374 = vmatprep.subr.mxu0 0.0
        %1375 = vmatpush1.msra.mxu0 %v1346
        %1376 = vmatprep.subr.mxu0 0.0
        %1377 = vmatpush1.msra.mxu0 %v1347
        %1378 = vmatprep.subr.mxu0 0.0
        %1379 = vmatpush1.msra.mxu0 %v1348
        %1380 = vmatprep.subr.mxu0 0.0
        %1381 = vmatpush1.msra.mxu0 %v1349
        %1382 = vmatprep.subr.mxu0 0.0
        %1383 = vmatpush1.msra.mxu0 %v1350
        %1384 = vmatprep.subr.mxu0 0.0
        %1385 = vmatpush1.msra.mxu0 %v1351
        %1386 = vmatprep.subr.mxu0 0.0
        %1387 = vmatpush1.msra.mxu0 %v1352
        %1388 = vmatprep.subr.mxu0 0.0
        %1389 = vmatpush1.msra.mxu0 %v1353
        %1390 = vmatprep.subr.mxu0 0.0
        %1391 = vmatpush1.msra.mxu0 %v1354
        %1392 = vmatprep.subr.mxu0 0.0
        %1393 = vmatpush1.msra.mxu0 %v1355
        %1394 = vmatprep.subr.mxu0 0.0
        %1395 = vmatpush1.msra.mxu0 %v1356
        %1396 = vmatprep.subr.mxu0 0.0
        %1397 = vmatpush1.msra.mxu0 0.0
        %1398 = vmatprep.subr.mxu0 0.0
        %1399 = vmatpush1.msra.mxu0 0.0
        %1400 = vmatprep.subr.mxu0 0.0
        %1401 = vmatpush1.msra.mxu0 0.0
        %1402 = vmatprep.subr.mxu0 0.0
        %1403 = vmatpush1.msra.mxu0 0.0
        %1404 = vmatprep.subr.mxu0 0.0
        %1405 = vmatpush1.msra.mxu0 0.0
        %1406 = vmatprep.subr.mxu0 0.0
        %1407 = vmatpush1.msra.mxu0 0.0
        %1408 = vmatprep.subr.mxu0 0.0
        %1409 = vmatpush1.msra.mxu0 0.0
        %1410 = vmatprep.subr.mxu0 0.0
        %1411 = vmatpush1.msra.mxu0 0.0
        %1412 = vmatprep.subr.mxu0 0.0
        %1413 = vmatpush1.msra.mxu0 0.0
        %1414 = vmatprep.subr.mxu0 0.0
        %1415 = vmatpush1.msra.mxu0 0.0
        %1416 = vmatprep.subr.mxu0 0.0
        %1417 = vmatpush1.msra.mxu0 0.0
        %1418 = vmatprep.subr.mxu0 0.0
        %1419 = vmatpush1.msra.mxu0 0.0
        %1420 = vmatprep.subr.mxu0 0.0
        %1421 = vmatpush1.msra.mxu0 0.0
        %1422 = vmatprep.subr.mxu0 0.0
        %1423 = vmatpush1.msra.mxu0 0.0
        %1424 = vmatprep.subr.mxu0 0.0
        %1425 = vmatpush1.msra.mxu0 0.0
        %1426 = vmatprep.subr.mxu0 0.0
        %1427 = vmatpush1.msra.mxu0 0.0
        %1428 = vmatprep.mubr.f32.mxu0 0.0
        %1429 = vmatmul.mubr.f32.gmra.mrb[0].mxu0 %v1340
        %v1430 = vpop.f32.mrb[0].mxu0
        %v1431 = vadd.f32 %v1362, %v1430
        %v1432 = vpop.f32.mrb[0].mxu0
        %1433 = vdwg.mxu0
        %1434 = vst.msk [vmem:[%s403] sm:$0xff] %vm690, %v1431
        %s1435 = sand.u32 %s279, 1
        %s1436 = scalar_lea.sflag [#allocation3], %s1435
        %s1437 = sand.u32 %s279, 1
        %s1438 = smul.addr %s1437, 8
        %s1439 = scalar_lea.vmem [#allocation2], %s1438
        // Predicated region
        $region65: #{multi_head_attention.1} parent=63 // pred_check
          %p1440 = pneg %p289
        $region66: #{multi_head_attention.1} parent=63 // pred_check_branch
          %1442 = sbr.rel (%p1440) target = $region68
        $region67: #{multi_head_attention.1} parent=63 // pred_region
          %s1444 = ssub.s32 128, 128
          %1445 = vsyncadd %s1436, %s1444
          %s1446 = smul.addr %s25, 128
          %s1447 = scalar_lea.hbm %s11, %s1446
          %s1449 = sshll.u32 %s1439, 4
          %s1450 = int_to_ptr.vmem [resolvable:$true] %s1449
          %1452 = dma.vmem_to_hbm [thread:$0]  %s1450, 128, %s1447, %s1436
        $region68: #{multi_head_attention.1} parent=63 // pred_fallthru
          _
      $region64: #{multi_head_attention.1} parent=5 // pred_fallthru
        _
      %p1453 = scmp.le.s32.totalorder 2, %s20
      // Predicated region
      $region69: #{multi_head_attention.1} parent=5 // pred_check
        %p1454 = pneg %p1453
      $region70: #{multi_head_attention.1} parent=5 // pred_check_branch
        %1456 = sbr.rel (%p1454) target = $region72
      $region71: #{multi_head_attention.1} parent=5 // pred_region
        %s1457 = ssub.s32 %s20, 2
        // Predicated region
        $region73: #{multi_head_attention.1} parent=71 // pred_check
          %p1458 = pneg %p295
        $region74: #{multi_head_attention.1} parent=71 // pred_check_branch
          %1460 = sbr.rel (%p1458) target = $region76
        $region75: #{multi_head_attention.1} parent=71 // pred_region
          %s1461 = sand.u32 %s280, 1
          %s1462 = scalar_lea.sflag [#allocation3], %s1461
          %s1463 = sand.u32 %s280, 1
          %s1464 = smul.addr %s1463, 8
          %s1465 = scalar_lea.vmem [#allocation2], %s1464
          %1466 = dma.done %s1462, 128
        $region76: #{multi_head_attention.1} parent=71 // pred_fallthru
          _
      $region72: #{multi_head_attention.1} parent=5 // pred_fallthru
        _
    $region6: #{multi_head_attention.1} parent=1 // loop_footer
      %s24 = sadd.s32 1, %s20
    $region7: #{multi_head_attention.1} parent=1 // loop_footer_branch
      %19 = sbr.rel target = $region3
    $region8: #{multi_head_attention.1} parent=1 // loop_exit
      _
    %1467 = vsyncpa [#allocation3], 1
    %s1468 = scalar_lea.sflag [#allocation3], 1
    %1469 = vsyncpa %s1468, 1

</llo_original>
